<compile_context>
chip_gen: v7x
topology: tpu7x:2x2x1
jax: 0.10.0
libtpu: 0.0.40
codegen_flags: <defaults>
</compile_context>

<pallas_src>
import functools

import jax
import jax.numpy as jnp
from jax.experimental import pallas as pl
from jax.experimental.pallas import tpu as pltpu

BN_EPS = 1e-5
LN_EPS = 1e-5
LANE = 128          # TPU lane width; hidden/head dims are padded to this.


def _batchnorm(h, gamma, beta):
    # BatchNorm1d, training-mode (biased) statistics over axis 0, single pass.
    mu = jnp.mean(h, axis=0, keepdims=True)
    ms = jnp.mean(h * h, axis=0, keepdims=True)
    var = jnp.maximum(ms - mu * mu, 0.0)
    return (h - mu) * jax.lax.rsqrt(var + BN_EPS) * gamma + beta


def _layernorm(h, gamma, beta, valid_width):
    # LayerNorm over the feature axis; padded lanes are exactly zero, so the
    # sums over 128 lanes equal the sums over the `valid_width` real lanes;
    # divide by the valid width to keep PyTorch semantics.
    inv = jnp.float32(1.0 / valid_width)
    mu = jnp.sum(h, axis=1, keepdims=True) * inv
    ms = jnp.sum(h * h, axis=1, keepdims=True) * inv
    var = jnp.maximum(ms - mu * mu, 0.0)
    return (h - mu) * jax.lax.rsqrt(var + LN_EPS) * gamma + beta


def gin_kernel(
    x_ref, adj_ref, poolb_ref,
    w0_ref, b0_ref,
    gw1_ref, gb1_ref, g1g_ref, g1b_ref,
    gw2_ref, gb2_ref, g2g_ref, g2b_ref,
    lng_ref, lnb_ref,
    fc1w_ref, fc1b_ref, bn1g_ref, bn1b_ref,
    fc2w_ref, fc2b_ref, bn2g_ref, bn2b_ref,
    fc3w_ref, fc3b_ref,
    out_ref,
    *, hidden_valid,
):
    f32 = jnp.float32
    bf16 = jnp.bfloat16

    x = x_ref[...]              # [N, 128] f32 (feature dim zero-padded)
    adj = adj_ref[...]          # [N, N]   bf16, adj[i, j] = #edges j -> i
    pool_bias = poolb_ref[...]  # [N, G]   f32, 0.0 if node in graph g else -1e30

    # Input linear + ReLU (lane-dense 128-wide output).
    h = jnp.dot(x, w0_ref[...], preferred_element_type=f32) + b0_ref[...]
    h = jnp.maximum(h, 0.0)

    num_layers = gw1_ref.shape[0]
    for l in range(num_layers):  # static unroll, num_layers is small
        # Hoist this layer's parameter loads once.
        gw1 = gw1_ref[l]; gb1 = gb1_ref[l]; g1g = g1g_ref[l]; g1b = g1b_ref[l]
        gw2 = gw2_ref[l]; gb2 = gb2_ref[l]; g2g = g2g_ref[l]; g2b = g2b_ref[l]
        lng = lng_ref[l]; lnb = lnb_ref[l]

        # GINConv (eps = 0): x_i + sum_{j in N(i)} x_j   (bf16 MXU, f32 accum)
        agg = jnp.dot(adj, h.astype(bf16), preferred_element_type=f32)
        z = h + agg
        # MLP: Linear -> BN -> ReLU -> Linear -> BN -> ReLU
        z = jnp.dot(z, gw1, preferred_element_type=f32) + gb1
        z = jnp.maximum(_batchnorm(z, g1g, g1b), 0.0)
        z = jnp.dot(z, gw2, preferred_element_type=f32) + gb2
        z = jnp.maximum(_batchnorm(z, g2g, g2b), 0.0)
        # outer .relu() (idempotent here) then LayerNorm over valid lanes
        h = _layernorm(jnp.maximum(z, 0.0), lng, lnb, hidden_valid)

    # global_max_pool over nodes of each graph: one vectorized masked reduce.
    # [N, 1, H] + [N, G, 1] -> [N, G, H], max over nodes -> [G, H]
    p = jnp.max(h[:, None, :] + pool_bias[:, :, None], axis=0)

    # Classifier head: fc1 -> relu -> bn1 -> fc2 -> relu -> bn2 -> fc3 -> sigmoid
    z = jnp.dot(p, fc1w_ref[...], preferred_element_type=f32) + fc1b_ref[...]
    z = _batchnorm(jnp.maximum(z, 0.0), bn1g_ref[...], bn1b_ref[...])
    z = jnp.dot(z, fc2w_ref[...], preferred_element_type=f32) + fc2b_ref[...]
    z = _batchnorm(jnp.maximum(z, 0.0), bn2g_ref[...], bn2b_ref[...])
    z = jnp.dot(z, fc3w_ref[...], preferred_element_type=f32) + fc3b_ref[...]
    # Sigmoid: exp on EUP, approximate reciprocal on EUP (VALU divide avoided).
    out_ref[...] = pl.reciprocal(1.0 + jnp.exp(-z), approx=True)


def gin_classifier_forward(x, edge_index, batch, params, num_graphs,
                           hidden_valid, out_channels):
    """Glue: build bf16 adjacency + additive pooling bias, call fused kernel."""
    n, in_c = x.shape
    src, dst = edge_index[0], edge_index[1]
    # out[i] = sum over edges (src -> i) of h[src]  =>  adj[dst, src] += 1
    adj = jnp.zeros((n, n), jnp.float32).at[dst, src].add(1.0)
    adj = adj.astype(jnp.bfloat16)       # small integer counts -> exact in bf16

    # Additive pooling bias [N, G]: 0 where node n belongs to graph g, -1e30 else.
    gids = jnp.arange(num_graphs, dtype=batch.dtype)
    pool_bias = jnp.where(batch[:, None] == gids[None, :],
                          jnp.float32(0.0), jnp.float32(-1e30))

    # Lane-pad the input features to 128 (zeros; matching weight rows are zero).
    x_pad = jnp.pad(x.astype(jnp.float32), ((0, 0), (0, LANE - in_c)))

    args = [x_pad, adj, pool_bias] + list(params)
    vmem = pl.BlockSpec(memory_space=pltpu.MemorySpace.VMEM)

    out_pad = pl.pallas_call(
        functools.partial(gin_kernel, hidden_valid=hidden_valid),
        out_shape=jax.ShapeDtypeStruct((num_graphs, LANE), jnp.float32),
        in_specs=[vmem] * len(args),
        out_specs=vmem,
        compiler_params=pltpu.CompilerParams(
            vmem_limit_bytes=48 * 1024 * 1024),
    )(*args)
    # Padded output lanes are sigmoid(0) = 0.5; slice to the real out_channels.
    return out_pad[:, :out_channels]


# ----------------------------- parameter setup ------------------------------

def _pad2(a, rows, cols):
    out = jnp.zeros((rows, cols), jnp.float32)
    return out.at[:a.shape[0], :a.shape[1]].set(a)


def _linear_init(key, fan_in, fan_out):
    # Deterministic kaiming-uniform-like init; weight stored transposed
    # ([fan_in, fan_out]) so the kernel computes x @ W.
    kw, kb = jax.random.split(key)
    bound = jnp.sqrt(6.0 / fan_in)
    w = jax.random.uniform(kw, (fan_in, fan_out), jnp.float32, -bound, bound)
    b = jax.random.uniform(kb, (1, fan_out), jnp.float32, -bound, bound)
    return w, b


def _padded_linear_init(key, fan_in, fan_out, rows=LANE, cols=LANE):
    w, b = _linear_init(key, fan_in, fan_out)
    return _pad2(w, rows, cols), _pad2(b, 1, cols)


def _padded_affine(valid_width, cols=LANE):
    # gamma = 1 on valid lanes, 0 on padded lanes (keeps padded lanes at 0).
    gamma = jnp.zeros((1, cols), jnp.float32).at[:, :valid_width].set(1.0)
    beta = jnp.zeros((1, cols), jnp.float32)
    return gamma, beta


def make_params(key, in_channels, hidden, out_channels, num_layers):
    keys = jax.random.split(key, 8 + 4 * num_layers)
    ki = iter(keys)

    w0, b0 = _padded_linear_init(next(ki), in_channels, hidden)

    gw1, gb1, g1g, g1b = [], [], [], []
    gw2, gb2, g2g, g2b = [], [], [], []
    lng, lnb = [], []
    for _ in range(num_layers):
        w1, b1 = _padded_linear_init(next(ki), hidden, hidden)
        w2, b2 = _padded_linear_init(next(ki), hidden, hidden)
        ag, ab = _padded_affine(hidden)
        gw1.append(w1); gb1.append(b1); g1g.append(ag); g1b.append(ab)
        gw2.append(w2); gb2.append(b2); g2g.append(ag); g2b.append(ab)
        lg, lb = _padded_affine(hidden)
        lng.append(lg); lnb.append(lb)
        next(ki); next(ki)  # keep key consumption deterministic/stable

    stack = lambda xs: jnp.stack(xs, axis=0)
    fc1w, fc1b = _padded_linear_init(next(ki), hidden, 64)
    bn1g, bn1b = _padded_affine(64)
    fc2w, fc2b = _padded_linear_init(next(ki), 64, 32)
    bn2g, bn2b = _padded_affine(32)
    fc3w, fc3b = _padded_linear_init(next(ki), 32, out_channels)

    return (
        w0, b0,
        stack(gw1), stack(gb1), stack(g1g), stack(g1b),
        stack(gw2), stack(gb2), stack(g2g), stack(g2b),
        stack(lng), stack(lnb),
        fc1w, fc1b, bn1g, bn1b,
        fc2w, fc2b, bn2g, bn2b,
        fc3w, fc3b,
    )


if __name__ == "__main__":
    key = jax.random.PRNGKey(0)
    k_x, k_src, k_dst, k_p = jax.random.split(key, 4)

    N, E, G = 16, 32, 2                 # nodes, edges, graphs
    IN_C, HIDDEN, OUT_C, LAYERS = 4, 32, 2, 2

    x = jax.random.normal(k_x, (N, IN_C), jnp.float32)
    src = jax.random.randint(k_src, (E,), 0, N, dtype=jnp.int32)
    dst = jax.random.randint(k_dst, (E,), 0, N, dtype=jnp.int32)
    edge_index = jnp.stack([src, dst], axis=0)       # [2, E]
    batch = jnp.concatenate(
        [jnp.zeros(N // 2, jnp.int32), jnp.ones(N - N // 2, jnp.int32)])

    params = make_params(k_p, IN_C, HIDDEN, OUT_C, LAYERS)

    out = gin_classifier_forward(x, edge_index, batch, params,
                                 num_graphs=G, hidden_valid=HIDDEN,
                                 out_channels=OUT_C)
    jax.block_until_ready(out)
    assert out.shape == (G, OUT_C)
    print("KERNEL_OK")
</pallas_src>

<mosaic_0001>
module attributes {stable_mosaic.version = 11 : i64} {
  func.func @gin_kernel(%arg0: memref<16x128xf32, #tpu.memory_space<vmem>>, %arg1: memref<16x16xbf16, #tpu.memory_space<vmem>>, %arg2: memref<16x2xf32, #tpu.memory_space<vmem>>, %arg3: memref<128x128xf32, #tpu.memory_space<vmem>>, %arg4: memref<1x128xf32, #tpu.memory_space<vmem>>, %arg5: memref<2x128x128xf32, #tpu.memory_space<vmem>>, %arg6: memref<2x1x128xf32, #tpu.memory_space<vmem>>, %arg7: memref<2x1x128xf32, #tpu.memory_space<vmem>>, %arg8: memref<2x1x128xf32, #tpu.memory_space<vmem>>, %arg9: memref<2x128x128xf32, #tpu.memory_space<vmem>>, %arg10: memref<2x1x128xf32, #tpu.memory_space<vmem>>, %arg11: memref<2x1x128xf32, #tpu.memory_space<vmem>>, %arg12: memref<2x1x128xf32, #tpu.memory_space<vmem>>, %arg13: memref<2x1x128xf32, #tpu.memory_space<vmem>>, %arg14: memref<2x1x128xf32, #tpu.memory_space<vmem>>, %arg15: memref<128x128xf32, #tpu.memory_space<vmem>>, %arg16: memref<1x128xf32, #tpu.memory_space<vmem>>, %arg17: memref<1x128xf32, #tpu.memory_space<vmem>>, %arg18: memref<1x128xf32, #tpu.memory_space<vmem>>, %arg19: memref<128x128xf32, #tpu.memory_space<vmem>>, %arg20: memref<1x128xf32, #tpu.memory_space<vmem>>, %arg21: memref<1x128xf32, #tpu.memory_space<vmem>>, %arg22: memref<1x128xf32, #tpu.memory_space<vmem>>, %arg23: memref<128x128xf32, #tpu.memory_space<vmem>>, %arg24: memref<1x128xf32, #tpu.memory_space<vmem>>, %arg25: memref<2x128xf32, #tpu.memory_space<vmem>>) attributes {dimension_semantics = [], scalar_prefetch = 0 : i64, scratch_operands = 0 : i64, tpu.core_type = #tpu.core_type<tc>} {
    %c0 = arith.constant 0 : index
    %c0_0 = arith.constant 0 : index
    %0 = vector.load %arg0[%c0, %c0_0] : memref<16x128xf32, #tpu.memory_space<vmem>>, vector<16x128xf32>
    %c0_1 = arith.constant 0 : index
    %c0_2 = arith.constant 0 : index
    %1 = vector.load %arg1[%c0_1, %c0_2] : memref<16x16xbf16, #tpu.memory_space<vmem>>, vector<16x16xbf16>
    %c0_3 = arith.constant 0 : index
    %c0_4 = arith.constant 0 : index
    %2 = vector.load %arg2[%c0_3, %c0_4] : memref<16x2xf32, #tpu.memory_space<vmem>>, vector<16x2xf32>
    %c0_5 = arith.constant 0 : index
    %c0_6 = arith.constant 0 : index
    %3 = vector.load %arg3[%c0_5, %c0_6] : memref<128x128xf32, #tpu.memory_space<vmem>>, vector<128x128xf32>
    %cst = arith.constant dense<0.000000e+00> : vector<16x128xf32>
    %4 = tpu.matmul %0, %3, %cst {dimension_numbers = #tpu.dot_dimension_numbers<[1], [0], [0], [1], [0, 0, 1, 1], [], []>} : vector<16x128xf32>, vector<128x128xf32>, vector<16x128xf32> -> vector<16x128xf32>
    %c0_7 = arith.constant 0 : index
    %c0_8 = arith.constant 0 : index
    %5 = vector.load %arg4[%c0_7, %c0_8] : memref<1x128xf32, #tpu.memory_space<vmem>>, vector<1x128xf32>
    %6 = vector.broadcast %5 : vector<1x128xf32> to vector<16x128xf32>
    %7 = arith.addf %4, %6 : vector<16x128xf32>
    %cst_9 = arith.constant 0.000000e+00 : f32
    %8 = vector.broadcast %cst_9 : f32 to vector<16x128xf32>
    %9 = arith.maximumf %7, %8 : vector<16x128xf32>
    %c0_10 = arith.constant 0 : index
    %c0_11 = arith.constant 0 : index
    %c0_12 = arith.constant 0 : index
    %10 = vector.load %arg5[%c0_10, %c0_11, %c0_12] : memref<2x128x128xf32, #tpu.memory_space<vmem>>, vector<1x128x128xf32>
    %11 = vector.shape_cast %10 : vector<1x128x128xf32> to vector<128x128xf32>
    %c0_13 = arith.constant 0 : index
    %c0_14 = arith.constant 0 : index
    %c0_15 = arith.constant 0 : index
    %12 = vector.load %arg6[%c0_13, %c0_14, %c0_15] : memref<2x1x128xf32, #tpu.memory_space<vmem>>, vector<1x1x128xf32>
    %13 = vector.shape_cast %12 : vector<1x1x128xf32> to vector<1x128xf32>
    %c0_16 = arith.constant 0 : index
    %c0_17 = arith.constant 0 : index
    %c0_18 = arith.constant 0 : index
    %14 = vector.load %arg7[%c0_16, %c0_17, %c0_18] : memref<2x1x128xf32, #tpu.memory_space<vmem>>, vector<1x1x128xf32>
    %15 = vector.shape_cast %14 : vector<1x1x128xf32> to vector<1x128xf32>
    %c0_19 = arith.constant 0 : index
    %c0_20 = arith.constant 0 : index
    %c0_21 = arith.constant 0 : index
    %16 = vector.load %arg8[%c0_19, %c0_20, %c0_21] : memref<2x1x128xf32, #tpu.memory_space<vmem>>, vector<1x1x128xf32>
    %17 = vector.shape_cast %16 : vector<1x1x128xf32> to vector<1x128xf32>
    %c0_22 = arith.constant 0 : index
    %c0_23 = arith.constant 0 : index
    %c0_24 = arith.constant 0 : index
    %18 = vector.load %arg9[%c0_22, %c0_23, %c0_24] : memref<2x128x128xf32, #tpu.memory_space<vmem>>, vector<1x128x128xf32>
    %19 = vector.shape_cast %18 : vector<1x128x128xf32> to vector<128x128xf32>
    %c0_25 = arith.constant 0 : index
    %c0_26 = arith.constant 0 : index
    %c0_27 = arith.constant 0 : index
    %20 = vector.load %arg10[%c0_25, %c0_26, %c0_27] : memref<2x1x128xf32, #tpu.memory_space<vmem>>, vector<1x1x128xf32>
    %21 = vector.shape_cast %20 : vector<1x1x128xf32> to vector<1x128xf32>
    %c0_28 = arith.constant 0 : index
    %c0_29 = arith.constant 0 : index
    %c0_30 = arith.constant 0 : index
    %22 = vector.load %arg11[%c0_28, %c0_29, %c0_30] : memref<2x1x128xf32, #tpu.memory_space<vmem>>, vector<1x1x128xf32>
    %23 = vector.shape_cast %22 : vector<1x1x128xf32> to vector<1x128xf32>
    %c0_31 = arith.constant 0 : index
    %c0_32 = arith.constant 0 : index
    %c0_33 = arith.constant 0 : index
    %24 = vector.load %arg12[%c0_31, %c0_32, %c0_33] : memref<2x1x128xf32, #tpu.memory_space<vmem>>, vector<1x1x128xf32>
    %25 = vector.shape_cast %24 : vector<1x1x128xf32> to vector<1x128xf32>
    %c0_34 = arith.constant 0 : index
    %c0_35 = arith.constant 0 : index
    %c0_36 = arith.constant 0 : index
    %26 = vector.load %arg13[%c0_34, %c0_35, %c0_36] : memref<2x1x128xf32, #tpu.memory_space<vmem>>, vector<1x1x128xf32>
    %27 = vector.shape_cast %26 : vector<1x1x128xf32> to vector<1x128xf32>
    %c0_37 = arith.constant 0 : index
    %c0_38 = arith.constant 0 : index
    %c0_39 = arith.constant 0 : index
    %28 = vector.load %arg14[%c0_37, %c0_38, %c0_39] : memref<2x1x128xf32, #tpu.memory_space<vmem>>, vector<1x1x128xf32>
    %29 = vector.shape_cast %28 : vector<1x1x128xf32> to vector<1x128xf32>
    %30 = arith.truncf %9 : vector<16x128xf32> to vector<16x128xbf16>
    %cst_40 = arith.constant dense<0.000000e+00> : vector<16x128xf32>
    %31 = tpu.matmul %1, %30, %cst_40 {dimension_numbers = #tpu.dot_dimension_numbers<[1], [0], [0], [1], [0, 0, 1, 1], [], []>} : vector<16x16xbf16>, vector<16x128xbf16>, vector<16x128xf32> -> vector<16x128xf32>
    %32 = arith.addf %9, %31 : vector<16x128xf32>
    %cst_41 = arith.constant dense<0.000000e+00> : vector<16x128xf32>
    %33 = tpu.matmul %32, %11, %cst_41 {dimension_numbers = #tpu.dot_dimension_numbers<[1], [0], [0], [1], [0, 0, 1, 1], [], []>} : vector<16x128xf32>, vector<128x128xf32>, vector<16x128xf32> -> vector<16x128xf32>
    %34 = vector.broadcast %13 : vector<1x128xf32> to vector<16x128xf32>
    %35 = arith.addf %33, %34 : vector<16x128xf32>
    %cst_42 = arith.constant dense<0.000000e+00> : vector<128xf32>
    %36 = vector.multi_reduction <add>, %35, %cst_42 [0] : vector<16x128xf32> to vector<128xf32>
    %37 = vector.shape_cast %36 : vector<128xf32> to vector<1x128xf32>
    %cst_43 = arith.constant 1.600000e+01 : f32
    %38 = vector.broadcast %cst_43 : f32 to vector<1x128xf32>
    %39 = arith.divf %37, %38 : vector<1x128xf32>
    %40 = arith.mulf %35, %35 : vector<16x128xf32>
    %cst_44 = arith.constant dense<0.000000e+00> : vector<128xf32>
    %41 = vector.multi_reduction <add>, %40, %cst_44 [0] : vector<16x128xf32> to vector<128xf32>
    %42 = vector.shape_cast %41 : vector<128xf32> to vector<1x128xf32>
    %cst_45 = arith.constant 1.600000e+01 : f32
    %43 = vector.broadcast %cst_45 : f32 to vector<1x128xf32>
    %44 = arith.divf %42, %43 : vector<1x128xf32>
    %45 = arith.mulf %39, %39 : vector<1x128xf32>
    %46 = arith.subf %44, %45 : vector<1x128xf32>
    %cst_46 = arith.constant 0.000000e+00 : f32
    %47 = vector.broadcast %cst_46 : f32 to vector<1x128xf32>
    %48 = arith.maximumf %46, %47 : vector<1x128xf32>
    %49 = vector.broadcast %39 : vector<1x128xf32> to vector<16x128xf32>
    %50 = arith.subf %35, %49 : vector<16x128xf32>
    %cst_47 = arith.constant 9.99999974E-6 : f32
    %51 = vector.broadcast %cst_47 : f32 to vector<1x128xf32>
    %52 = arith.addf %48, %51 : vector<1x128xf32>
    %53 = math.rsqrt %52 : vector<1x128xf32>
    %54 = vector.broadcast %53 : vector<1x128xf32> to vector<16x128xf32>
    %55 = arith.mulf %50, %54 : vector<16x128xf32>
    %56 = vector.broadcast %15 : vector<1x128xf32> to vector<16x128xf32>
    %57 = arith.mulf %55, %56 : vector<16x128xf32>
    %58 = vector.broadcast %17 : vector<1x128xf32> to vector<16x128xf32>
    %59 = arith.addf %57, %58 : vector<16x128xf32>
    %cst_48 = arith.constant 0.000000e+00 : f32
    %60 = vector.broadcast %cst_48 : f32 to vector<16x128xf32>
    %61 = arith.maximumf %59, %60 : vector<16x128xf32>
    %cst_49 = arith.constant dense<0.000000e+00> : vector<16x128xf32>
    %62 = tpu.matmul %61, %19, %cst_49 {dimension_numbers = #tpu.dot_dimension_numbers<[1], [0], [0], [1], [0, 0, 1, 1], [], []>} : vector<16x128xf32>, vector<128x128xf32>, vector<16x128xf32> -> vector<16x128xf32>
    %63 = vector.broadcast %21 : vector<1x128xf32> to vector<16x128xf32>
    %64 = arith.addf %62, %63 : vector<16x128xf32>
    %cst_50 = arith.constant dense<0.000000e+00> : vector<128xf32>
    %65 = vector.multi_reduction <add>, %64, %cst_50 [0] : vector<16x128xf32> to vector<128xf32>
    %66 = vector.shape_cast %65 : vector<128xf32> to vector<1x128xf32>
    %cst_51 = arith.constant 1.600000e+01 : f32
    %67 = vector.broadcast %cst_51 : f32 to vector<1x128xf32>
    %68 = arith.divf %66, %67 : vector<1x128xf32>
    %69 = arith.mulf %64, %64 : vector<16x128xf32>
    %cst_52 = arith.constant dense<0.000000e+00> : vector<128xf32>
    %70 = vector.multi_reduction <add>, %69, %cst_52 [0] : vector<16x128xf32> to vector<128xf32>
    %71 = vector.shape_cast %70 : vector<128xf32> to vector<1x128xf32>
    %cst_53 = arith.constant 1.600000e+01 : f32
    %72 = vector.broadcast %cst_53 : f32 to vector<1x128xf32>
    %73 = arith.divf %71, %72 : vector<1x128xf32>
    %74 = arith.mulf %68, %68 : vector<1x128xf32>
    %75 = arith.subf %73, %74 : vector<1x128xf32>
    %cst_54 = arith.constant 0.000000e+00 : f32
    %76 = vector.broadcast %cst_54 : f32 to vector<1x128xf32>
    %77 = arith.maximumf %75, %76 : vector<1x128xf32>
    %78 = vector.broadcast %68 : vector<1x128xf32> to vector<16x128xf32>
    %79 = arith.subf %64, %78 : vector<16x128xf32>
    %cst_55 = arith.constant 9.99999974E-6 : f32
    %80 = vector.broadcast %cst_55 : f32 to vector<1x128xf32>
    %81 = arith.addf %77, %80 : vector<1x128xf32>
    %82 = math.rsqrt %81 : vector<1x128xf32>
    %83 = vector.broadcast %82 : vector<1x128xf32> to vector<16x128xf32>
    %84 = arith.mulf %79, %83 : vector<16x128xf32>
    %85 = vector.broadcast %23 : vector<1x128xf32> to vector<16x128xf32>
    %86 = arith.mulf %84, %85 : vector<16x128xf32>
    %87 = vector.broadcast %25 : vector<1x128xf32> to vector<16x128xf32>
    %88 = arith.addf %86, %87 : vector<16x128xf32>
    %cst_56 = arith.constant 0.000000e+00 : f32
    %89 = vector.broadcast %cst_56 : f32 to vector<16x128xf32>
    %90 = arith.maximumf %88, %89 : vector<16x128xf32>
    %cst_57 = arith.constant 0.000000e+00 : f32
    %91 = vector.broadcast %cst_57 : f32 to vector<16x128xf32>
    %92 = arith.maximumf %90, %91 : vector<16x128xf32>
    %cst_58 = arith.constant dense<0.000000e+00> : vector<16xf32>
    %93 = vector.multi_reduction <add>, %92, %cst_58 [1] : vector<16x128xf32> to vector<16xf32>
    %94 = vector.shape_cast %93 : vector<16xf32> to vector<16x1xf32>
    %cst_59 = arith.constant 3.125000e-02 : f32
    %95 = vector.broadcast %cst_59 : f32 to vector<16x1xf32>
    %96 = arith.mulf %94, %95 : vector<16x1xf32>
    %97 = arith.mulf %92, %92 : vector<16x128xf32>
    %cst_60 = arith.constant dense<0.000000e+00> : vector<16xf32>
    %98 = vector.multi_reduction <add>, %97, %cst_60 [1] : vector<16x128xf32> to vector<16xf32>
    %99 = vector.shape_cast %98 : vector<16xf32> to vector<16x1xf32>
    %cst_61 = arith.constant 3.125000e-02 : f32
    %100 = vector.broadcast %cst_61 : f32 to vector<16x1xf32>
    %101 = arith.mulf %99, %100 : vector<16x1xf32>
    %102 = arith.mulf %96, %96 : vector<16x1xf32>
    %103 = arith.subf %101, %102 : vector<16x1xf32>
    %cst_62 = arith.constant 0.000000e+00 : f32
    %104 = vector.broadcast %cst_62 : f32 to vector<16x1xf32>
    %105 = arith.maximumf %103, %104 : vector<16x1xf32>
    %106 = vector.broadcast %96 : vector<16x1xf32> to vector<16x128xf32>
    %107 = arith.subf %92, %106 : vector<16x128xf32>
    %cst_63 = arith.constant 9.99999974E-6 : f32
    %108 = vector.broadcast %cst_63 : f32 to vector<16x1xf32>
    %109 = arith.addf %105, %108 : vector<16x1xf32>
    %110 = math.rsqrt %109 : vector<16x1xf32>
    %111 = vector.broadcast %110 : vector<16x1xf32> to vector<16x128xf32>
    %112 = arith.mulf %107, %111 : vector<16x128xf32>
    %113 = vector.broadcast %27 : vector<1x128xf32> to vector<16x128xf32>
    %114 = arith.mulf %112, %113 : vector<16x128xf32>
    %115 = vector.broadcast %29 : vector<1x128xf32> to vector<16x128xf32>
    %116 = arith.addf %114, %115 : vector<16x128xf32>
    %c1 = arith.constant 1 : index
    %c0_64 = arith.constant 0 : index
    %c0_65 = arith.constant 0 : index
    %117 = vector.load %arg5[%c1, %c0_64, %c0_65] : memref<2x128x128xf32, #tpu.memory_space<vmem>>, vector<1x128x128xf32>
    %118 = vector.shape_cast %117 : vector<1x128x128xf32> to vector<128x128xf32>
    %c1_66 = arith.constant 1 : index
    %c0_67 = arith.constant 0 : index
    %c0_68 = arith.constant 0 : index
    %119 = vector.load %arg6[%c1_66, %c0_67, %c0_68] : memref<2x1x128xf32, #tpu.memory_space<vmem>>, vector<1x1x128xf32>
    %120 = vector.shape_cast %119 : vector<1x1x128xf32> to vector<1x128xf32>
    %c1_69 = arith.constant 1 : index
    %c0_70 = arith.constant 0 : index
    %c0_71 = arith.constant 0 : index
    %121 = vector.load %arg7[%c1_69, %c0_70, %c0_71] : memref<2x1x128xf32, #tpu.memory_space<vmem>>, vector<1x1x128xf32>
    %122 = vector.shape_cast %121 : vector<1x1x128xf32> to vector<1x128xf32>
    %c1_72 = arith.constant 1 : index
    %c0_73 = arith.constant 0 : index
    %c0_74 = arith.constant 0 : index
    %123 = vector.load %arg8[%c1_72, %c0_73, %c0_74] : memref<2x1x128xf32, #tpu.memory_space<vmem>>, vector<1x1x128xf32>
    %124 = vector.shape_cast %123 : vector<1x1x128xf32> to vector<1x128xf32>
    %c1_75 = arith.constant 1 : index
    %c0_76 = arith.constant 0 : index
    %c0_77 = arith.constant 0 : index
    %125 = vector.load %arg9[%c1_75, %c0_76, %c0_77] : memref<2x128x128xf32, #tpu.memory_space<vmem>>, vector<1x128x128xf32>
    %126 = vector.shape_cast %125 : vector<1x128x128xf32> to vector<128x128xf32>
    %c1_78 = arith.constant 1 : index
    %c0_79 = arith.constant 0 : index
    %c0_80 = arith.constant 0 : index
    %127 = vector.load %arg10[%c1_78, %c0_79, %c0_80] : memref<2x1x128xf32, #tpu.memory_space<vmem>>, vector<1x1x128xf32>
    %128 = vector.shape_cast %127 : vector<1x1x128xf32> to vector<1x128xf32>
    %c1_81 = arith.constant 1 : index
    %c0_82 = arith.constant 0 : index
    %c0_83 = arith.constant 0 : index
    %129 = vector.load %arg11[%c1_81, %c0_82, %c0_83] : memref<2x1x128xf32, #tpu.memory_space<vmem>>, vector<1x1x128xf32>
    %130 = vector.shape_cast %129 : vector<1x1x128xf32> to vector<1x128xf32>
    %c1_84 = arith.constant 1 : index
    %c0_85 = arith.constant 0 : index
    %c0_86 = arith.constant 0 : index
    %131 = vector.load %arg12[%c1_84, %c0_85, %c0_86] : memref<2x1x128xf32, #tpu.memory_space<vmem>>, vector<1x1x128xf32>
    %132 = vector.shape_cast %131 : vector<1x1x128xf32> to vector<1x128xf32>
    %c1_87 = arith.constant 1 : index
    %c0_88 = arith.constant 0 : index
    %c0_89 = arith.constant 0 : index
    %133 = vector.load %arg13[%c1_87, %c0_88, %c0_89] : memref<2x1x128xf32, #tpu.memory_space<vmem>>, vector<1x1x128xf32>
    %134 = vector.shape_cast %133 : vector<1x1x128xf32> to vector<1x128xf32>
    %c1_90 = arith.constant 1 : index
    %c0_91 = arith.constant 0 : index
    %c0_92 = arith.constant 0 : index
    %135 = vector.load %arg14[%c1_90, %c0_91, %c0_92] : memref<2x1x128xf32, #tpu.memory_space<vmem>>, vector<1x1x128xf32>
    %136 = vector.shape_cast %135 : vector<1x1x128xf32> to vector<1x128xf32>
    %137 = arith.truncf %116 : vector<16x128xf32> to vector<16x128xbf16>
    %cst_93 = arith.constant dense<0.000000e+00> : vector<16x128xf32>
    %138 = tpu.matmul %1, %137, %cst_93 {dimension_numbers = #tpu.dot_dimension_numbers<[1], [0], [0], [1], [0, 0, 1, 1], [], []>} : vector<16x16xbf16>, vector<16x128xbf16>, vector<16x128xf32> -> vector<16x128xf32>
    %139 = arith.addf %116, %138 : vector<16x128xf32>
    %cst_94 = arith.constant dense<0.000000e+00> : vector<16x128xf32>
    %140 = tpu.matmul %139, %118, %cst_94 {dimension_numbers = #tpu.dot_dimension_numbers<[1], [0], [0], [1], [0, 0, 1, 1], [], []>} : vector<16x128xf32>, vector<128x128xf32>, vector<16x128xf32> -> vector<16x128xf32>
    %141 = vector.broadcast %120 : vector<1x128xf32> to vector<16x128xf32>
    %142 = arith.addf %140, %141 : vector<16x128xf32>
    %cst_95 = arith.constant dense<0.000000e+00> : vector<128xf32>
    %143 = vector.multi_reduction <add>, %142, %cst_95 [0] : vector<16x128xf32> to vector<128xf32>
    %144 = vector.shape_cast %143 : vector<128xf32> to vector<1x128xf32>
    %cst_96 = arith.constant 1.600000e+01 : f32
    %145 = vector.broadcast %cst_96 : f32 to vector<1x128xf32>
    %146 = arith.divf %144, %145 : vector<1x128xf32>
    %147 = arith.mulf %142, %142 : vector<16x128xf32>
    %cst_97 = arith.constant dense<0.000000e+00> : vector<128xf32>
    %148 = vector.multi_reduction <add>, %147, %cst_97 [0] : vector<16x128xf32> to vector<128xf32>
    %149 = vector.shape_cast %148 : vector<128xf32> to vector<1x128xf32>
    %cst_98 = arith.constant 1.600000e+01 : f32
    %150 = vector.broadcast %cst_98 : f32 to vector<1x128xf32>
    %151 = arith.divf %149, %150 : vector<1x128xf32>
    %152 = arith.mulf %146, %146 : vector<1x128xf32>
    %153 = arith.subf %151, %152 : vector<1x128xf32>
    %cst_99 = arith.constant 0.000000e+00 : f32
    %154 = vector.broadcast %cst_99 : f32 to vector<1x128xf32>
    %155 = arith.maximumf %153, %154 : vector<1x128xf32>
    %156 = vector.broadcast %146 : vector<1x128xf32> to vector<16x128xf32>
    %157 = arith.subf %142, %156 : vector<16x128xf32>
    %cst_100 = arith.constant 9.99999974E-6 : f32
    %158 = vector.broadcast %cst_100 : f32 to vector<1x128xf32>
    %159 = arith.addf %155, %158 : vector<1x128xf32>
    %160 = math.rsqrt %159 : vector<1x128xf32>
    %161 = vector.broadcast %160 : vector<1x128xf32> to vector<16x128xf32>
    %162 = arith.mulf %157, %161 : vector<16x128xf32>
    %163 = vector.broadcast %122 : vector<1x128xf32> to vector<16x128xf32>
    %164 = arith.mulf %162, %163 : vector<16x128xf32>
    %165 = vector.broadcast %124 : vector<1x128xf32> to vector<16x128xf32>
    %166 = arith.addf %164, %165 : vector<16x128xf32>
    %cst_101 = arith.constant 0.000000e+00 : f32
    %167 = vector.broadcast %cst_101 : f32 to vector<16x128xf32>
    %168 = arith.maximumf %166, %167 : vector<16x128xf32>
    %cst_102 = arith.constant dense<0.000000e+00> : vector<16x128xf32>
    %169 = tpu.matmul %168, %126, %cst_102 {dimension_numbers = #tpu.dot_dimension_numbers<[1], [0], [0], [1], [0, 0, 1, 1], [], []>} : vector<16x128xf32>, vector<128x128xf32>, vector<16x128xf32> -> vector<16x128xf32>
    %170 = vector.broadcast %128 : vector<1x128xf32> to vector<16x128xf32>
    %171 = arith.addf %169, %170 : vector<16x128xf32>
    %cst_103 = arith.constant dense<0.000000e+00> : vector<128xf32>
    %172 = vector.multi_reduction <add>, %171, %cst_103 [0] : vector<16x128xf32> to vector<128xf32>
    %173 = vector.shape_cast %172 : vector<128xf32> to vector<1x128xf32>
    %cst_104 = arith.constant 1.600000e+01 : f32
    %174 = vector.broadcast %cst_104 : f32 to vector<1x128xf32>
    %175 = arith.divf %173, %174 : vector<1x128xf32>
    %176 = arith.mulf %171, %171 : vector<16x128xf32>
    %cst_105 = arith.constant dense<0.000000e+00> : vector<128xf32>
    %177 = vector.multi_reduction <add>, %176, %cst_105 [0] : vector<16x128xf32> to vector<128xf32>
    %178 = vector.shape_cast %177 : vector<128xf32> to vector<1x128xf32>
    %cst_106 = arith.constant 1.600000e+01 : f32
    %179 = vector.broadcast %cst_106 : f32 to vector<1x128xf32>
    %180 = arith.divf %178, %179 : vector<1x128xf32>
    %181 = arith.mulf %175, %175 : vector<1x128xf32>
    %182 = arith.subf %180, %181 : vector<1x128xf32>
    %cst_107 = arith.constant 0.000000e+00 : f32
    %183 = vector.broadcast %cst_107 : f32 to vector<1x128xf32>
    %184 = arith.maximumf %182, %183 : vector<1x128xf32>
    %185 = vector.broadcast %175 : vector<1x128xf32> to vector<16x128xf32>
    %186 = arith.subf %171, %185 : vector<16x128xf32>
    %cst_108 = arith.constant 9.99999974E-6 : f32
    %187 = vector.broadcast %cst_108 : f32 to vector<1x128xf32>
    %188 = arith.addf %184, %187 : vector<1x128xf32>
    %189 = math.rsqrt %188 : vector<1x128xf32>
    %190 = vector.broadcast %189 : vector<1x128xf32> to vector<16x128xf32>
    %191 = arith.mulf %186, %190 : vector<16x128xf32>
    %192 = vector.broadcast %130 : vector<1x128xf32> to vector<16x128xf32>
    %193 = arith.mulf %191, %192 : vector<16x128xf32>
    %194 = vector.broadcast %132 : vector<1x128xf32> to vector<16x128xf32>
    %195 = arith.addf %193, %194 : vector<16x128xf32>
    %cst_109 = arith.constant 0.000000e+00 : f32
    %196 = vector.broadcast %cst_109 : f32 to vector<16x128xf32>
    %197 = arith.maximumf %195, %196 : vector<16x128xf32>
    %cst_110 = arith.constant 0.000000e+00 : f32
    %198 = vector.broadcast %cst_110 : f32 to vector<16x128xf32>
    %199 = arith.maximumf %197, %198 : vector<16x128xf32>
    %cst_111 = arith.constant dense<0.000000e+00> : vector<16xf32>
    %200 = vector.multi_reduction <add>, %199, %cst_111 [1] : vector<16x128xf32> to vector<16xf32>
    %201 = vector.shape_cast %200 : vector<16xf32> to vector<16x1xf32>
    %cst_112 = arith.constant 3.125000e-02 : f32
    %202 = vector.broadcast %cst_112 : f32 to vector<16x1xf32>
    %203 = arith.mulf %201, %202 : vector<16x1xf32>
    %204 = arith.mulf %199, %199 : vector<16x128xf32>
    %cst_113 = arith.constant dense<0.000000e+00> : vector<16xf32>
    %205 = vector.multi_reduction <add>, %204, %cst_113 [1] : vector<16x128xf32> to vector<16xf32>
    %206 = vector.shape_cast %205 : vector<16xf32> to vector<16x1xf32>
    %cst_114 = arith.constant 3.125000e-02 : f32
    %207 = vector.broadcast %cst_114 : f32 to vector<16x1xf32>
    %208 = arith.mulf %206, %207 : vector<16x1xf32>
    %209 = arith.mulf %203, %203 : vector<16x1xf32>
    %210 = arith.subf %208, %209 : vector<16x1xf32>
    %cst_115 = arith.constant 0.000000e+00 : f32
    %211 = vector.broadcast %cst_115 : f32 to vector<16x1xf32>
    %212 = arith.maximumf %210, %211 : vector<16x1xf32>
    %213 = vector.broadcast %203 : vector<16x1xf32> to vector<16x128xf32>
    %214 = arith.subf %199, %213 : vector<16x128xf32>
    %cst_116 = arith.constant 9.99999974E-6 : f32
    %215 = vector.broadcast %cst_116 : f32 to vector<16x1xf32>
    %216 = arith.addf %212, %215 : vector<16x1xf32>
    %217 = math.rsqrt %216 : vector<16x1xf32>
    %218 = vector.broadcast %217 : vector<16x1xf32> to vector<16x128xf32>
    %219 = arith.mulf %214, %218 : vector<16x128xf32>
    %220 = vector.broadcast %134 : vector<1x128xf32> to vector<16x128xf32>
    %221 = arith.mulf %219, %220 : vector<16x128xf32>
    %222 = vector.broadcast %136 : vector<1x128xf32> to vector<16x128xf32>
    %223 = arith.addf %221, %222 : vector<16x128xf32>
    %224 = vector.shape_cast %223 : vector<16x128xf32> to vector<16x1x128xf32>
    %225 = vector.shape_cast %2 : vector<16x2xf32> to vector<16x2x1xf32>
    %226 = vector.broadcast %224 : vector<16x1x128xf32> to vector<16x2x128xf32>
    %227 = vector.broadcast %225 : vector<16x2x1xf32> to vector<16x2x128xf32>
    %228 = arith.addf %226, %227 : vector<16x2x128xf32>
    %cst_117 = arith.constant dense<0xFF800000> : vector<2x128xf32>
    %229 = vector.multi_reduction <maximumf>, %228, %cst_117 [0] : vector<16x2x128xf32> to vector<2x128xf32>
    %c0_118 = arith.constant 0 : index
    %c0_119 = arith.constant 0 : index
    %230 = vector.load %arg15[%c0_118, %c0_119] : memref<128x128xf32, #tpu.memory_space<vmem>>, vector<128x128xf32>
    %cst_120 = arith.constant dense<0.000000e+00> : vector<2x128xf32>
    %231 = tpu.matmul %229, %230, %cst_120 {dimension_numbers = #tpu.dot_dimension_numbers<[1], [0], [0], [1], [0, 0, 1, 1], [], []>} : vector<2x128xf32>, vector<128x128xf32>, vector<2x128xf32> -> vector<2x128xf32>
    %c0_121 = arith.constant 0 : index
    %c0_122 = arith.constant 0 : index
    %232 = vector.load %arg16[%c0_121, %c0_122] : memref<1x128xf32, #tpu.memory_space<vmem>>, vector<1x128xf32>
    %233 = vector.broadcast %232 : vector<1x128xf32> to vector<2x128xf32>
    %234 = arith.addf %231, %233 : vector<2x128xf32>
    %cst_123 = arith.constant 0.000000e+00 : f32
    %235 = vector.broadcast %cst_123 : f32 to vector<2x128xf32>
    %236 = arith.maximumf %234, %235 : vector<2x128xf32>
    %c0_124 = arith.constant 0 : index
    %c0_125 = arith.constant 0 : index
    %237 = vector.load %arg17[%c0_124, %c0_125] : memref<1x128xf32, #tpu.memory_space<vmem>>, vector<1x128xf32>
    %c0_126 = arith.constant 0 : index
    %c0_127 = arith.constant 0 : index
    %238 = vector.load %arg18[%c0_126, %c0_127] : memref<1x128xf32, #tpu.memory_space<vmem>>, vector<1x128xf32>
    %cst_128 = arith.constant dense<0.000000e+00> : vector<128xf32>
    %239 = vector.multi_reduction <add>, %236, %cst_128 [0] : vector<2x128xf32> to vector<128xf32>
    %240 = vector.shape_cast %239 : vector<128xf32> to vector<1x128xf32>
    %cst_129 = arith.constant 2.000000e+00 : f32
    %241 = vector.broadcast %cst_129 : f32 to vector<1x128xf32>
    %242 = arith.divf %240, %241 : vector<1x128xf32>
    %243 = arith.mulf %236, %236 : vector<2x128xf32>
    %cst_130 = arith.constant dense<0.000000e+00> : vector<128xf32>
    %244 = vector.multi_reduction <add>, %243, %cst_130 [0] : vector<2x128xf32> to vector<128xf32>
    %245 = vector.shape_cast %244 : vector<128xf32> to vector<1x128xf32>
    %cst_131 = arith.constant 2.000000e+00 : f32
    %246 = vector.broadcast %cst_131 : f32 to vector<1x128xf32>
    %247 = arith.divf %245, %246 : vector<1x128xf32>
    %248 = arith.mulf %242, %242 : vector<1x128xf32>
    %249 = arith.subf %247, %248 : vector<1x128xf32>
    %cst_132 = arith.constant 0.000000e+00 : f32
    %250 = vector.broadcast %cst_132 : f32 to vector<1x128xf32>
    %251 = arith.maximumf %249, %250 : vector<1x128xf32>
    %252 = vector.broadcast %242 : vector<1x128xf32> to vector<2x128xf32>
    %253 = arith.subf %236, %252 : vector<2x128xf32>
    %cst_133 = arith.constant 9.99999974E-6 : f32
    %254 = vector.broadcast %cst_133 : f32 to vector<1x128xf32>
    %255 = arith.addf %251, %254 : vector<1x128xf32>
    %256 = math.rsqrt %255 : vector<1x128xf32>
    %257 = vector.broadcast %256 : vector<1x128xf32> to vector<2x128xf32>
    %258 = arith.mulf %253, %257 : vector<2x128xf32>
    %259 = vector.broadcast %237 : vector<1x128xf32> to vector<2x128xf32>
    %260 = arith.mulf %258, %259 : vector<2x128xf32>
    %261 = vector.broadcast %238 : vector<1x128xf32> to vector<2x128xf32>
    %262 = arith.addf %260, %261 : vector<2x128xf32>
    %c0_134 = arith.constant 0 : index
    %c0_135 = arith.constant 0 : index
    %263 = vector.load %arg19[%c0_134, %c0_135] : memref<128x128xf32, #tpu.memory_space<vmem>>, vector<128x128xf32>
    %cst_136 = arith.constant dense<0.000000e+00> : vector<2x128xf32>
    %264 = tpu.matmul %262, %263, %cst_136 {dimension_numbers = #tpu.dot_dimension_numbers<[1], [0], [0], [1], [0, 0, 1, 1], [], []>} : vector<2x128xf32>, vector<128x128xf32>, vector<2x128xf32> -> vector<2x128xf32>
    %c0_137 = arith.constant 0 : index
    %c0_138 = arith.constant 0 : index
    %265 = vector.load %arg20[%c0_137, %c0_138] : memref<1x128xf32, #tpu.memory_space<vmem>>, vector<1x128xf32>
    %266 = vector.broadcast %265 : vector<1x128xf32> to vector<2x128xf32>
    %267 = arith.addf %264, %266 : vector<2x128xf32>
    %cst_139 = arith.constant 0.000000e+00 : f32
    %268 = vector.broadcast %cst_139 : f32 to vector<2x128xf32>
    %269 = arith.maximumf %267, %268 : vector<2x128xf32>
    %c0_140 = arith.constant 0 : index
    %c0_141 = arith.constant 0 : index
    %270 = vector.load %arg21[%c0_140, %c0_141] : memref<1x128xf32, #tpu.memory_space<vmem>>, vector<1x128xf32>
    %c0_142 = arith.constant 0 : index
    %c0_143 = arith.constant 0 : index
    %271 = vector.load %arg22[%c0_142, %c0_143] : memref<1x128xf32, #tpu.memory_space<vmem>>, vector<1x128xf32>
    %cst_144 = arith.constant dense<0.000000e+00> : vector<128xf32>
    %272 = vector.multi_reduction <add>, %269, %cst_144 [0] : vector<2x128xf32> to vector<128xf32>
    %273 = vector.shape_cast %272 : vector<128xf32> to vector<1x128xf32>
    %cst_145 = arith.constant 2.000000e+00 : f32
    %274 = vector.broadcast %cst_145 : f32 to vector<1x128xf32>
    %275 = arith.divf %273, %274 : vector<1x128xf32>
    %276 = arith.mulf %269, %269 : vector<2x128xf32>
    %cst_146 = arith.constant dense<0.000000e+00> : vector<128xf32>
    %277 = vector.multi_reduction <add>, %276, %cst_146 [0] : vector<2x128xf32> to vector<128xf32>
    %278 = vector.shape_cast %277 : vector<128xf32> to vector<1x128xf32>
    %cst_147 = arith.constant 2.000000e+00 : f32
    %279 = vector.broadcast %cst_147 : f32 to vector<1x128xf32>
    %280 = arith.divf %278, %279 : vector<1x128xf32>
    %281 = arith.mulf %275, %275 : vector<1x128xf32>
    %282 = arith.subf %280, %281 : vector<1x128xf32>
    %cst_148 = arith.constant 0.000000e+00 : f32
    %283 = vector.broadcast %cst_148 : f32 to vector<1x128xf32>
    %284 = arith.maximumf %282, %283 : vector<1x128xf32>
    %285 = vector.broadcast %275 : vector<1x128xf32> to vector<2x128xf32>
    %286 = arith.subf %269, %285 : vector<2x128xf32>
    %cst_149 = arith.constant 9.99999974E-6 : f32
    %287 = vector.broadcast %cst_149 : f32 to vector<1x128xf32>
    %288 = arith.addf %284, %287 : vector<1x128xf32>
    %289 = math.rsqrt %288 : vector<1x128xf32>
    %290 = vector.broadcast %289 : vector<1x128xf32> to vector<2x128xf32>
    %291 = arith.mulf %286, %290 : vector<2x128xf32>
    %292 = vector.broadcast %270 : vector<1x128xf32> to vector<2x128xf32>
    %293 = arith.mulf %291, %292 : vector<2x128xf32>
    %294 = vector.broadcast %271 : vector<1x128xf32> to vector<2x128xf32>
    %295 = arith.addf %293, %294 : vector<2x128xf32>
    %c0_150 = arith.constant 0 : index
    %c0_151 = arith.constant 0 : index
    %296 = vector.load %arg23[%c0_150, %c0_151] : memref<128x128xf32, #tpu.memory_space<vmem>>, vector<128x128xf32>
    %cst_152 = arith.constant dense<0.000000e+00> : vector<2x128xf32>
    %297 = tpu.matmul %295, %296, %cst_152 {dimension_numbers = #tpu.dot_dimension_numbers<[1], [0], [0], [1], [0, 0, 1, 1], [], []>} : vector<2x128xf32>, vector<128x128xf32>, vector<2x128xf32> -> vector<2x128xf32>
    %c0_153 = arith.constant 0 : index
    %c0_154 = arith.constant 0 : index
    %298 = vector.load %arg24[%c0_153, %c0_154] : memref<1x128xf32, #tpu.memory_space<vmem>>, vector<1x128xf32>
    %299 = vector.broadcast %298 : vector<1x128xf32> to vector<2x128xf32>
    %300 = arith.addf %297, %299 : vector<2x128xf32>
    %cst_155 = arith.constant 0.000000e+00 : f32
    %301 = vector.broadcast %cst_155 : f32 to vector<2x128xf32>
    %302 = arith.subf %301, %300 : vector<2x128xf32>
    %303 = math.exp %302 : vector<2x128xf32>
    %cst_156 = arith.constant 1.000000e+00 : f32
    %304 = vector.broadcast %cst_156 : f32 to vector<2x128xf32>
    %305 = arith.addf %304, %303 : vector<2x128xf32>
    %306 = tpu.reciprocal %305 {approx = true} : vector<2x128xf32> -> vector<2x128xf32>
    %c0_157 = arith.constant 0 : index
    %c0_158 = arith.constant 0 : index
    %307 = vector.load %arg25[%c0_157, %c0_158] : memref<2x128xf32, #tpu.memory_space<vmem>>, vector<2x128xf32>
    tpu.vector_store %arg25[%c0_157, %c0_158], %306 {strides = array<i32>} : memref<2x128xf32, #tpu.memory_space<vmem>>, vector<2x128xf32>,
    return
  }
}

</mosaic_0001>

<llo_original>
// kernel: tpu_custom_call.1
$region0: #{tpu_custom_call.1}
  #allocation0 [shape = 'u32[]', space=smem, size = 0x4, offset = 0x4, fixed_abs, tag = 'smem constant byte address 0x4 - core index']
  #allocation1 [shape = 'u32[144,128]{1,0:T(1,128)}', space=vmem, size = 0x12000, scoped, tag = 'internal scratch']
  %s0 = inlined_call_operand.vmem [shape: f32[16,128], index: 0, kind: input, shape index: {}]
  %s1 = inlined_call_operand.hbm [shape: bf16[16,16], index: 1, kind: input, shape index: {}]
  %s2 = inlined_call_operand.vmem [shape: f32[16,2], index: 2, kind: input, shape index: {}]
  %s3 = inlined_call_operand.hbm [shape: f32[128,128], index: 3, kind: input, shape index: {}]
  %s4 = inlined_call_operand.vmem [shape: f32[1,128], index: 4, kind: input, shape index: {}]
  %s5 = inlined_call_operand.hbm [shape: f32[2,128,128], index: 5, kind: input, shape index: {}]
  %s6 = inlined_call_operand.vmem [shape: f32[2,1,128], index: 6, kind: input, shape index: {}]
  %s7 = inlined_call_operand.vmem [shape: f32[2,1,128], index: 7, kind: input, shape index: {}]
  %s8 = inlined_call_operand.vmem [shape: f32[2,1,128], index: 8, kind: input, shape index: {}]
  %s9 = inlined_call_operand.hbm [shape: f32[2,128,128], index: 9, kind: input, shape index: {}]
  %s10 = inlined_call_operand.vmem [shape: f32[2,1,128], index: 10, kind: input, shape index: {}]
  %s11 = inlined_call_operand.vmem [shape: f32[2,1,128], index: 11, kind: input, shape index: {}]
  %s12 = inlined_call_operand.vmem [shape: f32[2,1,128], index: 12, kind: input, shape index: {}]
  %s13 = inlined_call_operand.vmem [shape: f32[2,1,128], index: 13, kind: input, shape index: {}]
  %s14 = inlined_call_operand.vmem [shape: f32[2,1,128], index: 14, kind: input, shape index: {}]
  %s15 = inlined_call_operand.hbm [shape: f32[128,128], index: 15, kind: input, shape index: {}]
  %s16 = inlined_call_operand.vmem [shape: f32[1,128], index: 16, kind: input, shape index: {}]
  %s17 = inlined_call_operand.vmem [shape: f32[1,128], index: 17, kind: input, shape index: {}]
  %s18 = inlined_call_operand.vmem [shape: f32[1,128], index: 18, kind: input, shape index: {}]
  %s19 = inlined_call_operand.hbm [shape: f32[128,128], index: 19, kind: input, shape index: {}]
  %s20 = inlined_call_operand.vmem [shape: f32[1,128], index: 20, kind: input, shape index: {}]
  %s21 = inlined_call_operand.vmem [shape: f32[1,128], index: 21, kind: input, shape index: {}]
  %s22 = inlined_call_operand.vmem [shape: f32[1,128], index: 22, kind: input, shape index: {}]
  %s23 = inlined_call_operand.hbm [shape: f32[128,128], index: 23, kind: input, shape index: {}]
  %s24 = inlined_call_operand.vmem [shape: f32[1,128], index: 24, kind: input, shape index: {}]
  %s25 = inlined_call_operand.hbm [shape: f32[2,128], index: 25, kind: output, shape index: {}]
  %s26 = sld [smem:[#allocation0]]
  $region138: #{tpu_custom_call.1} parent=0
    _
  %s28 = ssub.s32 1, %s26
  %s29 = scalar_select 0, %s28, %s26
  $region1: #{tpu_custom_call.1} parent=0
    #allocation2 [shape = 'u8[4096]{0}', space=vmem, size = 0x1000, scoped, tag = 'input window, operand 1, single buffered']
    #allocation3 [shape = 's32[1]{0}', space=sflag, size = 0x4, scoped, tag = 'scoped memory for tpu_custom_call.1']
    #allocation4 [shape = 's32[1]{0}', space=sflag, size = 0x4, scoped, tag = 'scoped memory for tpu_custom_call.1']
    #allocation5 [shape = 'u8[65536]{0}', space=vmem, size = 0x10000, scoped, tag = 'input window, operand 3, single buffered']
    #allocation6 [shape = 's32[1]{0}', space=sflag, size = 0x4, scoped, tag = 'scoped memory for tpu_custom_call.1']
    #allocation7 [shape = 'u8[131072]{0}', space=vmem, size = 0x20000, scoped, tag = 'input window, operand 5, single buffered']
    #allocation8 [shape = 'u8[131072]{0}', space=vmem, size = 0x20000, scoped, tag = 'input window, operand 9, single buffered']
    #allocation9 [shape = 's32[1]{0}', space=sflag, size = 0x4, scoped, tag = 'scoped memory for tpu_custom_call.1']
    #allocation10 [shape = 'u8[65536]{0}', space=vmem, size = 0x10000, scoped, tag = 'input window, operand 15, single buffered']
    #allocation11 [shape = 'u8[65536]{0}', space=vmem, size = 0x10000, scoped, tag = 'input window, operand 19, single buffered']
    #allocation12 [shape = 's32[1]{0}', space=sflag, size = 0x4, scoped, tag = 'scoped memory for tpu_custom_call.1']
    #allocation13 [shape = 'u8[65536]{0}', space=vmem, size = 0x10000, scoped, tag = 'input window, operand 23, single buffered']
    #allocation14 [shape = 'u8[1024]{0}', space=vmem, size = 0x400, scoped, tag = 'output window, operand 0, single buffered']
    %30 = vsyncpa [#allocation3], 0
    %31 = vsyncpa [#allocation6], 0
    %32 = vsyncpa [#allocation9], 0
    %33 = vsyncpa [#allocation12], 0
    %34 = vsyncpa [#allocation4], 0
    // Predicated region
    $region2: #{tpu_custom_call.1} parent=1 // pred_check
      _
    $region3: #{tpu_custom_call.1} parent=1 // pred_check_branch
      %36 = sbr.rel (0) target = $region5
    $region4: #{tpu_custom_call.1} parent=1 // pred_region
      _
    $region5: #{tpu_custom_call.1} parent=1 // pred_fallthru
      _
    // Predicated region
    $region6: #{tpu_custom_call.1} parent=1 // pred_check
      _
    $region7: #{tpu_custom_call.1} parent=1 // pred_check_branch
      %38 = sbr.rel (0) target = $region9
    $region8: #{tpu_custom_call.1} parent=1 // pred_region
      %s40 = ssub.s32 128, 128
      %41 = vsyncadd [#allocation3], %s40
      %s42 = sshll.u32 [#allocation2], 4
      %s43 = int_to_ptr.vmem [resolvable:$true] %s42
      %48 = dma.hbm_to_vmem [thread:$0]  %s1, 128, %s43, [#allocation3], 64, 64, 4
    $region9: #{tpu_custom_call.1} parent=1 // pred_fallthru
      _
    // Predicated region
    $region10: #{tpu_custom_call.1} parent=1 // pred_check
      _
    $region11: #{tpu_custom_call.1} parent=1 // pred_check_branch
      %50 = sbr.rel (0) target = $region13
    $region12: #{tpu_custom_call.1} parent=1 // pred_region
      _
    $region13: #{tpu_custom_call.1} parent=1 // pred_fallthru
      _
    // Predicated region
    $region14: #{tpu_custom_call.1} parent=1 // pred_check
      _
    $region15: #{tpu_custom_call.1} parent=1 // pred_check_branch
      %52 = sbr.rel (0) target = $region17
    $region16: #{tpu_custom_call.1} parent=1 // pred_region
      %s54 = ssub.s32 2048, 2048
      %55 = vsyncadd [#allocation6], %s54
      %s56 = sshll.u32 [#allocation5], 4
      %s57 = int_to_ptr.vmem [resolvable:$true] %s56
      %62 = dma.hbm_to_vmem [thread:$0]  %s3, 2048, %s57, [#allocation6], 128, 128, 8
    $region17: #{tpu_custom_call.1} parent=1 // pred_fallthru
      _
    // Predicated region
    $region18: #{tpu_custom_call.1} parent=1 // pred_check
      _
    $region19: #{tpu_custom_call.1} parent=1 // pred_check_branch
      %64 = sbr.rel (0) target = $region21
    $region20: #{tpu_custom_call.1} parent=1 // pred_region
      _
    $region21: #{tpu_custom_call.1} parent=1 // pred_fallthru
      _
    // Predicated region
    $region22: #{tpu_custom_call.1} parent=1 // pred_check
      _
    $region23: #{tpu_custom_call.1} parent=1 // pred_check_branch
      %66 = sbr.rel (0) target = $region25
    $region24: #{tpu_custom_call.1} parent=1 // pred_region
      %s68 = ssub.s32 4096, 4096
      %69 = vsyncadd [#allocation6], %s68
      %s70 = sshll.u32 [#allocation7], 4
      %s71 = int_to_ptr.vmem [resolvable:$true] %s70
      %76 = dma.hbm_to_vmem [thread:$0]  %s5, 4096, %s71, [#allocation6], 128, 128, 8
    $region25: #{tpu_custom_call.1} parent=1 // pred_fallthru
      _
    // Predicated region
    $region26: #{tpu_custom_call.1} parent=1 // pred_check
      _
    $region27: #{tpu_custom_call.1} parent=1 // pred_check_branch
      %78 = sbr.rel (0) target = $region29
    $region28: #{tpu_custom_call.1} parent=1 // pred_region
      _
    $region29: #{tpu_custom_call.1} parent=1 // pred_fallthru
      _
    // Predicated region
    $region30: #{tpu_custom_call.1} parent=1 // pred_check
      _
    $region31: #{tpu_custom_call.1} parent=1 // pred_check_branch
      %80 = sbr.rel (0) target = $region33
    $region32: #{tpu_custom_call.1} parent=1 // pred_region
      _
    $region33: #{tpu_custom_call.1} parent=1 // pred_fallthru
      _
    // Predicated region
    $region34: #{tpu_custom_call.1} parent=1 // pred_check
      _
    $region35: #{tpu_custom_call.1} parent=1 // pred_check_branch
      %82 = sbr.rel (0) target = $region37
    $region36: #{tpu_custom_call.1} parent=1 // pred_region
      _
    $region37: #{tpu_custom_call.1} parent=1 // pred_fallthru
      _
    // Predicated region
    $region38: #{tpu_custom_call.1} parent=1 // pred_check
      _
    $region39: #{tpu_custom_call.1} parent=1 // pred_check_branch
      %84 = sbr.rel (0) target = $region41
    $region40: #{tpu_custom_call.1} parent=1 // pred_region
      %s86 = ssub.s32 4096, 4096
      %87 = vsyncadd [#allocation9], %s86
      %s88 = sshll.u32 [#allocation8], 4
      %s89 = int_to_ptr.vmem [resolvable:$true] %s88
      %94 = dma.hbm_to_vmem [thread:$0]  %s9, 4096, %s89, [#allocation9], 128, 128, 8
    $region41: #{tpu_custom_call.1} parent=1 // pred_fallthru
      _
    // Predicated region
    $region42: #{tpu_custom_call.1} parent=1 // pred_check
      _
    $region43: #{tpu_custom_call.1} parent=1 // pred_check_branch
      %96 = sbr.rel (0) target = $region45
    $region44: #{tpu_custom_call.1} parent=1 // pred_region
      _
    $region45: #{tpu_custom_call.1} parent=1 // pred_fallthru
      _
    // Predicated region
    $region46: #{tpu_custom_call.1} parent=1 // pred_check
      _
    $region47: #{tpu_custom_call.1} parent=1 // pred_check_branch
      %98 = sbr.rel (0) target = $region49
    $region48: #{tpu_custom_call.1} parent=1 // pred_region
      _
    $region49: #{tpu_custom_call.1} parent=1 // pred_fallthru
      _
    // Predicated region
    $region50: #{tpu_custom_call.1} parent=1 // pred_check
      _
    $region51: #{tpu_custom_call.1} parent=1 // pred_check_branch
      %100 = sbr.rel (0) target = $region53
    $region52: #{tpu_custom_call.1} parent=1 // pred_region
      _
    $region53: #{tpu_custom_call.1} parent=1 // pred_fallthru
      _
    // Predicated region
    $region54: #{tpu_custom_call.1} parent=1 // pred_check
      _
    $region55: #{tpu_custom_call.1} parent=1 // pred_check_branch
      %102 = sbr.rel (0) target = $region57
    $region56: #{tpu_custom_call.1} parent=1 // pred_region
      _
    $region57: #{tpu_custom_call.1} parent=1 // pred_fallthru
      _
    // Predicated region
    $region58: #{tpu_custom_call.1} parent=1 // pred_check
      _
    $region59: #{tpu_custom_call.1} parent=1 // pred_check_branch
      %104 = sbr.rel (0) target = $region61
    $region60: #{tpu_custom_call.1} parent=1 // pred_region
      _
    $region61: #{tpu_custom_call.1} parent=1 // pred_fallthru
      _
    // Predicated region
    $region62: #{tpu_custom_call.1} parent=1 // pred_check
      _
    $region63: #{tpu_custom_call.1} parent=1 // pred_check_branch
      %106 = sbr.rel (0) target = $region65
    $region64: #{tpu_custom_call.1} parent=1 // pred_region
      %s108 = ssub.s32 2048, 2048
      %109 = vsyncadd [#allocation9], %s108
      %s110 = sshll.u32 [#allocation10], 4
      %s111 = int_to_ptr.vmem [resolvable:$true] %s110
      %116 = dma.hbm_to_vmem [thread:$0]  %s15, 2048, %s111, [#allocation9], 128, 128, 8
    $region65: #{tpu_custom_call.1} parent=1 // pred_fallthru
      _
    // Predicated region
    $region66: #{tpu_custom_call.1} parent=1 // pred_check
      _
    $region67: #{tpu_custom_call.1} parent=1 // pred_check_branch
      %118 = sbr.rel (0) target = $region69
    $region68: #{tpu_custom_call.1} parent=1 // pred_region
      _
    $region69: #{tpu_custom_call.1} parent=1 // pred_fallthru
      _
    // Predicated region
    $region70: #{tpu_custom_call.1} parent=1 // pred_check
      _
    $region71: #{tpu_custom_call.1} parent=1 // pred_check_branch
      %120 = sbr.rel (0) target = $region73
    $region72: #{tpu_custom_call.1} parent=1 // pred_region
      _
    $region73: #{tpu_custom_call.1} parent=1 // pred_fallthru
      _
    // Predicated region
    $region74: #{tpu_custom_call.1} parent=1 // pred_check
      _
    $region75: #{tpu_custom_call.1} parent=1 // pred_check_branch
      %122 = sbr.rel (0) target = $region77
    $region76: #{tpu_custom_call.1} parent=1 // pred_region
      _
    $region77: #{tpu_custom_call.1} parent=1 // pred_fallthru
      _
    // Predicated region
    $region78: #{tpu_custom_call.1} parent=1 // pred_check
      _
    $region79: #{tpu_custom_call.1} parent=1 // pred_check_branch
      %124 = sbr.rel (0) target = $region81
    $region80: #{tpu_custom_call.1} parent=1 // pred_region
      %s126 = ssub.s32 2048, 2048
      %127 = vsyncadd [#allocation12], %s126
      %s128 = sshll.u32 [#allocation11], 4
      %s129 = int_to_ptr.vmem [resolvable:$true] %s128
      %134 = dma.hbm_to_vmem [thread:$0]  %s19, 2048, %s129, [#allocation12], 128, 128, 8
    $region81: #{tpu_custom_call.1} parent=1 // pred_fallthru
      _
    // Predicated region
    $region82: #{tpu_custom_call.1} parent=1 // pred_check
      _
    $region83: #{tpu_custom_call.1} parent=1 // pred_check_branch
      %136 = sbr.rel (0) target = $region85
    $region84: #{tpu_custom_call.1} parent=1 // pred_region
      _
    $region85: #{tpu_custom_call.1} parent=1 // pred_fallthru
      _
    // Predicated region
    $region86: #{tpu_custom_call.1} parent=1 // pred_check
      _
    $region87: #{tpu_custom_call.1} parent=1 // pred_check_branch
      %138 = sbr.rel (0) target = $region89
    $region88: #{tpu_custom_call.1} parent=1 // pred_region
      _
    $region89: #{tpu_custom_call.1} parent=1 // pred_fallthru
      _
    // Predicated region
    $region90: #{tpu_custom_call.1} parent=1 // pred_check
      _
    $region91: #{tpu_custom_call.1} parent=1 // pred_check_branch
      %140 = sbr.rel (0) target = $region93
    $region92: #{tpu_custom_call.1} parent=1 // pred_region
      _
    $region93: #{tpu_custom_call.1} parent=1 // pred_fallthru
      _
    // Predicated region
    $region94: #{tpu_custom_call.1} parent=1 // pred_check
      _
    $region95: #{tpu_custom_call.1} parent=1 // pred_check_branch
      %142 = sbr.rel (0) target = $region97
    $region96: #{tpu_custom_call.1} parent=1 // pred_region
      %s144 = ssub.s32 2048, 2048
      %145 = vsyncadd [#allocation12], %s144
      %s146 = sshll.u32 [#allocation13], 4
      %s147 = int_to_ptr.vmem [resolvable:$true] %s146
      %152 = dma.hbm_to_vmem [thread:$0]  %s23, 2048, %s147, [#allocation12], 128, 128, 8
    $region97: #{tpu_custom_call.1} parent=1 // pred_fallthru
      _
    // Predicated region
    $region98: #{tpu_custom_call.1} parent=1 // pred_check
      _
    $region99: #{tpu_custom_call.1} parent=1 // pred_check_branch
      %154 = sbr.rel (0) target = $region101
    $region100: #{tpu_custom_call.1} parent=1 // pred_region
      _
    $region101: #{tpu_custom_call.1} parent=1 // pred_fallthru
      _
    // Predicated region
    $region102: #{tpu_custom_call.1} parent=1 // pred_check
      _
    $region103: #{tpu_custom_call.1} parent=1 // pred_check_branch
      %156 = sbr.rel (0) target = $region105
    $region104: #{tpu_custom_call.1} parent=1 // pred_region
      %157 = dma.done [#allocation3], 128
    $region105: #{tpu_custom_call.1} parent=1 // pred_fallthru
      _
    // Predicated region
    $region106: #{tpu_custom_call.1} parent=1 // pred_check
      _
    $region107: #{tpu_custom_call.1} parent=1 // pred_check_branch
      %159 = sbr.rel (0) target = $region109
    $region108: #{tpu_custom_call.1} parent=1 // pred_region
      %160 = dma.done [#allocation6], 2048
    $region109: #{tpu_custom_call.1} parent=1 // pred_fallthru
      _
    // Predicated region
    $region110: #{tpu_custom_call.1} parent=1 // pred_check
      _
    $region111: #{tpu_custom_call.1} parent=1 // pred_check_branch
      %162 = sbr.rel (0) target = $region113
    $region112: #{tpu_custom_call.1} parent=1 // pred_region
      %163 = dma.done [#allocation6], 4096
    $region113: #{tpu_custom_call.1} parent=1 // pred_fallthru
      _
    // Predicated region
    $region114: #{tpu_custom_call.1} parent=1 // pred_check
      _
    $region115: #{tpu_custom_call.1} parent=1 // pred_check_branch
      %165 = sbr.rel (0) target = $region117
    $region116: #{tpu_custom_call.1} parent=1 // pred_region
      %166 = dma.done [#allocation9], 4096
    $region117: #{tpu_custom_call.1} parent=1 // pred_fallthru
      _
    // Predicated region
    $region118: #{tpu_custom_call.1} parent=1 // pred_check
      _
    $region119: #{tpu_custom_call.1} parent=1 // pred_check_branch
      %168 = sbr.rel (0) target = $region121
    $region120: #{tpu_custom_call.1} parent=1 // pred_region
      %169 = dma.done [#allocation9], 2048
    $region121: #{tpu_custom_call.1} parent=1 // pred_fallthru
      _
    // Predicated region
    $region122: #{tpu_custom_call.1} parent=1 // pred_check
      _
    $region123: #{tpu_custom_call.1} parent=1 // pred_check_branch
      %171 = sbr.rel (0) target = $region125
    $region124: #{tpu_custom_call.1} parent=1 // pred_region
      %172 = dma.done [#allocation12], 2048
    $region125: #{tpu_custom_call.1} parent=1 // pred_fallthru
      _
    // Predicated region
    $region126: #{tpu_custom_call.1} parent=1 // pred_check
      _
    $region127: #{tpu_custom_call.1} parent=1 // pred_check_branch
      %174 = sbr.rel (0) target = $region129
    $region128: #{tpu_custom_call.1} parent=1 // pred_region
      %175 = dma.done [#allocation12], 2048
    $region129: #{tpu_custom_call.1} parent=1 // pred_fallthru
      _
    %v177 = vld [vmem:[%s0] sm:$0xff]
    %v178 = vld [vmem:[%s0 + $0x8] sm:$0xff]
    %v179 = vld [vmem:[#allocation2] sm:$0xf]
    %v180 = vld [vmem:[#allocation2 + $0x4] sm:$0xf]
    %v181 = vld [vmem:[%s2] sm:$0xff]
    %v182 = vld [vmem:[%s2 + $0x8] sm:$0xff]
    %v183 = vld [vmem:[#allocation5] sm:$0xff]
    %v184 = vld [vmem:[#allocation5 + $0x8] sm:$0xff]
    %v185 = vld [vmem:[#allocation5 + $0x10] sm:$0xff]
    %v186 = vld [vmem:[#allocation5 + $0x18] sm:$0xff]
    %v187 = vld [vmem:[#allocation5 + $0x20] sm:$0xff]
    %v188 = vld [vmem:[#allocation5 + $0x28] sm:$0xff]
    %v189 = vld [vmem:[#allocation5 + $0x30] sm:$0xff]
    %v190 = vld [vmem:[#allocation5 + $0x38] sm:$0xff]
    %v191 = vld [vmem:[#allocation5 + $0x40] sm:$0xff]
    %v192 = vld [vmem:[#allocation5 + $0x48] sm:$0xff]
    %v193 = vld [vmem:[#allocation5 + $0x50] sm:$0xff]
    %v194 = vld [vmem:[#allocation5 + $0x58] sm:$0xff]
    %v195 = vld [vmem:[#allocation5 + $0x60] sm:$0xff]
    %v196 = vld [vmem:[#allocation5 + $0x68] sm:$0xff]
    %v197 = vld [vmem:[#allocation5 + $0x70] sm:$0xff]
    %v198 = vld [vmem:[#allocation5 + $0x78] sm:$0xff]
    %v199 = vld [vmem:[%s4] sm:$0x1]
    %v201 = vlaneseq
    %v202 = vshrl.u32 %v201, 7
    %v203 = vsub.s32 0, %v202
    %v204 = vrot.slane %v199, %v203
    %206 = vmatprep.subr.mxu0 0.0
    %207 = vmatpush1.msra.mxu0 %v183
    %208 = vmatprep.subr.mxu0 0.0
    %209 = vmatpush1.msra.mxu0 %v184
    %210 = vmatprep.subr.mxu0 0.0
    %211 = vmatpush1.msra.mxu0 %v185
    %212 = vmatprep.subr.mxu0 0.0
    %213 = vmatpush1.msra.mxu0 %v186
    %214 = vmatprep.subr.mxu0 0.0
    %215 = vmatpush1.msra.mxu0 %v187
    %216 = vmatprep.subr.mxu0 0.0
    %217 = vmatpush1.msra.mxu0 %v188
    %218 = vmatprep.subr.mxu0 0.0
    %219 = vmatpush1.msra.mxu0 %v189
    %220 = vmatprep.subr.mxu0 0.0
    %221 = vmatpush1.msra.mxu0 %v190
    %222 = vmatprep.subr.mxu0 0.0
    %223 = vmatpush1.msra.mxu0 %v191
    %224 = vmatprep.subr.mxu0 0.0
    %225 = vmatpush1.msra.mxu0 %v192
    %226 = vmatprep.subr.mxu0 0.0
    %227 = vmatpush1.msra.mxu0 %v193
    %228 = vmatprep.subr.mxu0 0.0
    %229 = vmatpush1.msra.mxu0 %v194
    %230 = vmatprep.subr.mxu0 0.0
    %231 = vmatpush1.msra.mxu0 %v195
    %232 = vmatprep.subr.mxu0 0.0
    %233 = vmatpush1.msra.mxu0 %v196
    %234 = vmatprep.subr.mxu0 0.0
    %235 = vmatpush1.msra.mxu0 %v197
    %236 = vmatprep.subr.mxu0 0.0
    %237 = vmatpush1.msra.mxu0 %v198
    %238 = vmatprep.subr.mxu0 0.0
    %239 = vmatpush1.msra.mxu0 0.0
    %240 = vmatprep.subr.mxu0 0.0
    %241 = vmatpush1.msra.mxu0 0.0
    %242 = vmatprep.subr.mxu0 0.0
    %243 = vmatpush1.msra.mxu0 0.0
    %244 = vmatprep.subr.mxu0 0.0
    %245 = vmatpush1.msra.mxu0 0.0
    %246 = vmatprep.subr.mxu0 0.0
    %247 = vmatpush1.msra.mxu0 0.0
    %248 = vmatprep.subr.mxu0 0.0
    %249 = vmatpush1.msra.mxu0 0.0
    %250 = vmatprep.subr.mxu0 0.0
    %251 = vmatpush1.msra.mxu0 0.0
    %252 = vmatprep.subr.mxu0 0.0
    %253 = vmatpush1.msra.mxu0 0.0
    %254 = vmatprep.subr.mxu0 0.0
    %255 = vmatpush1.msra.mxu0 0.0
    %256 = vmatprep.subr.mxu0 0.0
    %257 = vmatpush1.msra.mxu0 0.0
    %258 = vmatprep.subr.mxu0 0.0
    %259 = vmatpush1.msra.mxu0 0.0
    %260 = vmatprep.subr.mxu0 0.0
    %261 = vmatpush1.msra.mxu0 0.0
    %262 = vmatprep.subr.mxu0 0.0
    %263 = vmatpush1.msra.mxu0 0.0
    %264 = vmatprep.subr.mxu0 0.0
    %265 = vmatpush1.msra.mxu0 0.0
    %266 = vmatprep.subr.mxu0 0.0
    %267 = vmatpush1.msra.mxu0 0.0
    %268 = vmatprep.subr.mxu0 0.0
    %269 = vmatpush1.msra.mxu0 0.0
    %270 = vmatprep.mubr.f32.mxu0 0.0
    %271 = vmatmul.mubr.f32.gmra.mrb[0].mxu0 %v177
    %v272 = vpop.f32.mrb[0].mxu0
    %v273 = vadd.f32 %v204, %v272
    %v274 = vpop.f32.mrb[0].mxu0
    %275 = vmatprep.mubr.f32.mxu0 0.0
    %276 = vmatmul.mubr.f32.gmra.mrb[0].mxu0 %v178
    %v277 = vpop.f32.mrb[0].mxu0
    %v278 = vadd.f32 %v204, %v277
    %v279 = vpop.f32.mrb[0].mxu0
    %280 = vdwg.mxu0
    %v281 = vmax.f32 %v273, 0.0
    %v282 = vmax.f32 %v278, 0.0
    %v283 = vld [vmem:[#allocation7] sm:$0xff]
    %v284 = vld [vmem:[#allocation7 + $0x8] sm:$0xff]
    %v285 = vld [vmem:[#allocation7 + $0x10] sm:$0xff]
    %v286 = vld [vmem:[#allocation7 + $0x18] sm:$0xff]
    %v287 = vld [vmem:[#allocation7 + $0x20] sm:$0xff]
    %v288 = vld [vmem:[#allocation7 + $0x28] sm:$0xff]
    %v289 = vld [vmem:[#allocation7 + $0x30] sm:$0xff]
    %v290 = vld [vmem:[#allocation7 + $0x38] sm:$0xff]
    %v291 = vld [vmem:[#allocation7 + $0x40] sm:$0xff]
    %v292 = vld [vmem:[#allocation7 + $0x48] sm:$0xff]
    %v293 = vld [vmem:[#allocation7 + $0x50] sm:$0xff]
    %v294 = vld [vmem:[#allocation7 + $0x58] sm:$0xff]
    %v295 = vld [vmem:[#allocation7 + $0x60] sm:$0xff]
    %v296 = vld [vmem:[#allocation7 + $0x68] sm:$0xff]
    %v297 = vld [vmem:[#allocation7 + $0x70] sm:$0xff]
    %v298 = vld [vmem:[#allocation7 + $0x78] sm:$0xff]
    %v299 = vld [vmem:[%s6] sm:$0x1]
    %v300 = vld [vmem:[%s7] sm:$0x1]
    %v301 = vld [vmem:[%s8] sm:$0x1]
    %v302 = vld [vmem:[#allocation8] sm:$0xff]
    %v303 = vld [vmem:[#allocation8 + $0x8] sm:$0xff]
    %v304 = vld [vmem:[#allocation8 + $0x10] sm:$0xff]
    %v305 = vld [vmem:[#allocation8 + $0x18] sm:$0xff]
    %v306 = vld [vmem:[#allocation8 + $0x20] sm:$0xff]
    %v307 = vld [vmem:[#allocation8 + $0x28] sm:$0xff]
    %v308 = vld [vmem:[#allocation8 + $0x30] sm:$0xff]
    %v309 = vld [vmem:[#allocation8 + $0x38] sm:$0xff]
    %v310 = vld [vmem:[#allocation8 + $0x40] sm:$0xff]
    %v311 = vld [vmem:[#allocation8 + $0x48] sm:$0xff]
    %v312 = vld [vmem:[#allocation8 + $0x50] sm:$0xff]
    %v313 = vld [vmem:[#allocation8 + $0x58] sm:$0xff]
    %v314 = vld [vmem:[#allocation8 + $0x60] sm:$0xff]
    %v315 = vld [vmem:[#allocation8 + $0x68] sm:$0xff]
    %v316 = vld [vmem:[#allocation8 + $0x70] sm:$0xff]
    %v317 = vld [vmem:[#allocation8 + $0x78] sm:$0xff]
    %v318 = vld [vmem:[%s10] sm:$0x1]
    %v319 = vld [vmem:[%s11] sm:$0x1]
    %v320 = vld [vmem:[%s12] sm:$0x1]
    %v321 = vld [vmem:[%s13] sm:$0x1]
    %v322 = vld [vmem:[%s14] sm:$0x1]
    %v323 = vpack.c.bf16 %v282, %v281
    %v326 = vunpack.c.l.b16 %v179
    %v327 = vunpack.c.l.b16 %v180
    %v328 = vpack.c.b16 %v327, %v326
    %vm329 = vcmask 130048
    %v331 = vsel %vm329, %v328, 0
    %333 = vmatprep.subr.bf16.mxu0 0
    %334 = vmatpush1.bf16.msra.mxu0 %v323
    %335 = vmatprep.subr.bf16.mxu0 0
    %336 = vmatpush1.bf16.msra.mxu0 0
    %337 = vmatprep.subr.bf16.mxu0 0
    %338 = vmatpush1.bf16.msra.mxu0 0
    %339 = vmatprep.subr.bf16.mxu0 0
    %340 = vmatpush1.bf16.msra.mxu0 0
    %341 = vmatprep.subr.bf16.mxu0 0
    %342 = vmatpush1.bf16.msra.mxu0 0
    %343 = vmatprep.subr.bf16.mxu0 0
    %344 = vmatpush1.bf16.msra.mxu0 0
    %345 = vmatprep.subr.bf16.mxu0 0
    %346 = vmatpush1.bf16.msra.mxu0 0
    %347 = vmatprep.subr.bf16.mxu0 0
    %348 = vmatpush1.bf16.msra.mxu0 0
    %349 = vmatprep.subr.bf16.mxu0 0
    %350 = vmatpush1.bf16.msra.mxu0 0
    %351 = vmatprep.subr.bf16.mxu0 0
    %352 = vmatpush1.bf16.msra.mxu0 0
    %353 = vmatprep.subr.bf16.mxu0 0
    %354 = vmatpush1.bf16.msra.mxu0 0
    %355 = vmatprep.subr.bf16.mxu0 0
    %356 = vmatpush1.bf16.msra.mxu0 0
    %357 = vmatprep.subr.bf16.mxu0 0
    %358 = vmatpush1.bf16.msra.mxu0 0
    %359 = vmatprep.subr.bf16.mxu0 0
    %360 = vmatpush1.bf16.msra.mxu0 0
    %361 = vmatprep.subr.bf16.mxu0 0
    %362 = vmatpush1.bf16.msra.mxu0 0
    %363 = vmatprep.subr.bf16.mxu0 0
    %364 = vmatpush1.bf16.msra.mxu0 0
    %365 = vmatprep.mubr.bf16.mxu0 0
    %366 = vmatmul.mubr.bf16.gmra.mrb[0].mxu0 %v331
    %v367 = vpop.f32.mrb[0].mxu0
    %v368 = vadd.f32 0.0, %v367
    %v369 = vpop.f32.mrb[0].mxu0
    %v370 = vpop.f32.mrb[0].mxu0
    %v371 = vadd.f32 0.0, %v370
    %v372 = vpop.f32.mrb[0].mxu0
    %373 = vdwg.mxu0
    %v374 = vadd.f32 %v281, %v368
    %v375 = vadd.f32 %v282, %v371
    %v377 = vlaneseq
    %v378 = vshrl.u32 %v377, 7
    %v379 = vsub.s32 0, %v378
    %v380 = vrot.slane %v299, %v379
    %382 = vmatprep.subr.mxu0 0.0
    %383 = vmatpush1.msra.mxu0 %v283
    %384 = vmatprep.subr.mxu0 0.0
    %385 = vmatpush1.msra.mxu0 %v284
    %386 = vmatprep.subr.mxu0 0.0
    %387 = vmatpush1.msra.mxu0 %v285
    %388 = vmatprep.subr.mxu0 0.0
    %389 = vmatpush1.msra.mxu0 %v286
    %390 = vmatprep.subr.mxu0 0.0
    %391 = vmatpush1.msra.mxu0 %v287
    %392 = vmatprep.subr.mxu0 0.0
    %393 = vmatpush1.msra.mxu0 %v288
    %394 = vmatprep.subr.mxu0 0.0
    %395 = vmatpush1.msra.mxu0 %v289
    %396 = vmatprep.subr.mxu0 0.0
    %397 = vmatpush1.msra.mxu0 %v290
    %398 = vmatprep.subr.mxu0 0.0
    %399 = vmatpush1.msra.mxu0 %v291
    %400 = vmatprep.subr.mxu0 0.0
    %401 = vmatpush1.msra.mxu0 %v292
    %402 = vmatprep.subr.mxu0 0.0
    %403 = vmatpush1.msra.mxu0 %v293
    %404 = vmatprep.subr.mxu0 0.0
    %405 = vmatpush1.msra.mxu0 %v294
    %406 = vmatprep.subr.mxu0 0.0
    %407 = vmatpush1.msra.mxu0 %v295
    %408 = vmatprep.subr.mxu0 0.0
    %409 = vmatpush1.msra.mxu0 %v296
    %410 = vmatprep.subr.mxu0 0.0
    %411 = vmatpush1.msra.mxu0 %v297
    %412 = vmatprep.subr.mxu0 0.0
    %413 = vmatpush1.msra.mxu0 %v298
    %414 = vmatprep.subr.mxu0 0.0
    %415 = vmatpush1.msra.mxu0 0.0
    %416 = vmatprep.subr.mxu0 0.0
    %417 = vmatpush1.msra.mxu0 0.0
    %418 = vmatprep.subr.mxu0 0.0
    %419 = vmatpush1.msra.mxu0 0.0
    %420 = vmatprep.subr.mxu0 0.0
    %421 = vmatpush1.msra.mxu0 0.0
    %422 = vmatprep.subr.mxu0 0.0
    %423 = vmatpush1.msra.mxu0 0.0
    %424 = vmatprep.subr.mxu0 0.0
    %425 = vmatpush1.msra.mxu0 0.0
    %426 = vmatprep.subr.mxu0 0.0
    %427 = vmatpush1.msra.mxu0 0.0
    %428 = vmatprep.subr.mxu0 0.0
    %429 = vmatpush1.msra.mxu0 0.0
    %430 = vmatprep.subr.mxu0 0.0
    %431 = vmatpush1.msra.mxu0 0.0
    %432 = vmatprep.subr.mxu0 0.0
    %433 = vmatpush1.msra.mxu0 0.0
    %434 = vmatprep.subr.mxu0 0.0
    %435 = vmatpush1.msra.mxu0 0.0
    %436 = vmatprep.subr.mxu0 0.0
    %437 = vmatpush1.msra.mxu0 0.0
    %438 = vmatprep.subr.mxu0 0.0
    %439 = vmatpush1.msra.mxu0 0.0
    %440 = vmatprep.subr.mxu0 0.0
    %441 = vmatpush1.msra.mxu0 0.0
    %442 = vmatprep.subr.mxu0 0.0
    %443 = vmatpush1.msra.mxu0 0.0
    %444 = vmatprep.subr.mxu0 0.0
    %445 = vmatpush1.msra.mxu0 0.0
    %446 = vmatprep.mubr.f32.mxu0 0.0
    %447 = vmatmul.mubr.f32.gmra.mrb[0].mxu0 %v374
    %v448 = vpop.f32.mrb[0].mxu0
    %v449 = vadd.f32 %v380, %v448
    %v450 = vpop.f32.mrb[0].mxu0
    %451 = vmatprep.mubr.f32.mxu0 0.0
    %452 = vmatmul.mubr.f32.gmra.mrb[0].mxu0 %v375
    %v453 = vpop.f32.mrb[0].mxu0
    %v454 = vadd.f32 %v380, %v453
    %v455 = vpop.f32.mrb[0].mxu0
    %456 = vdwg.mxu0
    %v457 = vadd.f32 %v449, %v454
    %v458 = vrot.slane %v457, 4
    %v459 = vadd.f32 %v457, %v458
    %v460 = vrot.slane %v459, 2
    %v461 = vadd.f32 %v459, %v460
    %v462 = vrot.slane %v461, 1
    %v463 = vadd.f32 %v461, %v462
    %v464 = vrcp.pop 16.0
    %v465 = vmul.f32 %v463, %v464
    %v466 = vmul.f32 %v449, %v449
    %v467 = vmul.f32 %v454, %v454
    %v468 = vadd.f32 %v466, %v467
    %v469 = vrot.slane %v468, 4
    %v470 = vadd.f32 %v468, %v469
    %v471 = vrot.slane %v470, 2
    %v472 = vadd.f32 %v470, %v471
    %v473 = vrot.slane %v472, 1
    %v474 = vadd.f32 %v472, %v473
    %v475 = vmul.f32 %v474, %v464
    %v476 = vmul.f32 %v465, %v465
    %v477 = vsub.f32 %v475, %v476
    %v478 = vmax.f32 %v477, 0.0
    %v479 = vsub.f32 %v449, %v465
    %v480 = vsub.f32 %v454, %v465
    %v481 = vadd.f32 %v478, 1e-05
    %v482 = vrsqrt.pop %v481
    %v483 = vmul.f32 %v479, %v482
    %v484 = vmul.f32 %v480, %v482
    %v486 = vlaneseq
    %v487 = vshrl.u32 %v486, 7
    %v488 = vsub.s32 0, %v487
    %v489 = vrot.slane %v300, %v488
    %v491 = vmul.f32 %v483, %v489
    %v492 = vmul.f32 %v484, %v489
    %v494 = vlaneseq
    %v495 = vshrl.u32 %v494, 7
    %v496 = vsub.s32 0, %v495
    %v497 = vrot.slane %v301, %v496
    %v499 = vadd.f32 %v491, %v497
    %v500 = vadd.f32 %v492, %v497
    %v501 = vmax.f32 %v499, 0.0
    %v502 = vmax.f32 %v500, 0.0
    %v504 = vlaneseq
    %v505 = vshrl.u32 %v504, 7
    %v506 = vsub.s32 0, %v505
    %v507 = vrot.slane %v318, %v506
    %509 = vmatprep.subr.mxu0 0.0
    %510 = vmatpush1.msra.mxu0 %v302
    %511 = vmatprep.subr.mxu0 0.0
    %512 = vmatpush1.msra.mxu0 %v303
    %513 = vmatprep.subr.mxu0 0.0
    %514 = vmatpush1.msra.mxu0 %v304
    %515 = vmatprep.subr.mxu0 0.0
    %516 = vmatpush1.msra.mxu0 %v305
    %517 = vmatprep.subr.mxu0 0.0
    %518 = vmatpush1.msra.mxu0 %v306
    %519 = vmatprep.subr.mxu0 0.0
    %520 = vmatpush1.msra.mxu0 %v307
    %521 = vmatprep.subr.mxu0 0.0
    %522 = vmatpush1.msra.mxu0 %v308
    %523 = vmatprep.subr.mxu0 0.0
    %524 = vmatpush1.msra.mxu0 %v309
    %525 = vmatprep.subr.mxu0 0.0
    %526 = vmatpush1.msra.mxu0 %v310
    %527 = vmatprep.subr.mxu0 0.0
    %528 = vmatpush1.msra.mxu0 %v311
    %529 = vmatprep.subr.mxu0 0.0
    %530 = vmatpush1.msra.mxu0 %v312
    %531 = vmatprep.subr.mxu0 0.0
    %532 = vmatpush1.msra.mxu0 %v313
    %533 = vmatprep.subr.mxu0 0.0
    %534 = vmatpush1.msra.mxu0 %v314
    %535 = vmatprep.subr.mxu0 0.0
    %536 = vmatpush1.msra.mxu0 %v315
    %537 = vmatprep.subr.mxu0 0.0
    %538 = vmatpush1.msra.mxu0 %v316
    %539 = vmatprep.subr.mxu0 0.0
    %540 = vmatpush1.msra.mxu0 %v317
    %541 = vmatprep.subr.mxu0 0.0
    %542 = vmatpush1.msra.mxu0 0.0
    %543 = vmatprep.subr.mxu0 0.0
    %544 = vmatpush1.msra.mxu0 0.0
    %545 = vmatprep.subr.mxu0 0.0
    %546 = vmatpush1.msra.mxu0 0.0
    %547 = vmatprep.subr.mxu0 0.0
    %548 = vmatpush1.msra.mxu0 0.0
    %549 = vmatprep.subr.mxu0 0.0
    %550 = vmatpush1.msra.mxu0 0.0
    %551 = vmatprep.subr.mxu0 0.0
    %552 = vmatpush1.msra.mxu0 0.0
    %553 = vmatprep.subr.mxu0 0.0
    %554 = vmatpush1.msra.mxu0 0.0
    %555 = vmatprep.subr.mxu0 0.0
    %556 = vmatpush1.msra.mxu0 0.0
    %557 = vmatprep.subr.mxu0 0.0
    %558 = vmatpush1.msra.mxu0 0.0
    %559 = vmatprep.subr.mxu0 0.0
    %560 = vmatpush1.msra.mxu0 0.0
    %561 = vmatprep.subr.mxu0 0.0
    %562 = vmatpush1.msra.mxu0 0.0
    %563 = vmatprep.subr.mxu0 0.0
    %564 = vmatpush1.msra.mxu0 0.0
    %565 = vmatprep.subr.mxu0 0.0
    %566 = vmatpush1.msra.mxu0 0.0
    %567 = vmatprep.subr.mxu0 0.0
    %568 = vmatpush1.msra.mxu0 0.0
    %569 = vmatprep.subr.mxu0 0.0
    %570 = vmatpush1.msra.mxu0 0.0
    %571 = vmatprep.subr.mxu0 0.0
    %572 = vmatpush1.msra.mxu0 0.0
    %573 = vmatprep.mubr.f32.mxu0 0.0
    %574 = vmatmul.mubr.f32.gmra.mrb[0].mxu0 %v501
    %v575 = vpop.f32.mrb[0].mxu0
    %v576 = vadd.f32 %v507, %v575
    %v577 = vpop.f32.mrb[0].mxu0
    %578 = vmatprep.mubr.f32.mxu0 0.0
    %579 = vmatmul.mubr.f32.gmra.mrb[0].mxu0 %v502
    %v580 = vpop.f32.mrb[0].mxu0
    %v581 = vadd.f32 %v507, %v580
    %v582 = vpop.f32.mrb[0].mxu0
    %583 = vdwg.mxu0
    %v584 = vadd.f32 %v576, %v581
    %v585 = vrot.slane %v584, 4
    %v586 = vadd.f32 %v584, %v585
    %v587 = vrot.slane %v586, 2
    %v588 = vadd.f32 %v586, %v587
    %v589 = vrot.slane %v588, 1
    %v590 = vadd.f32 %v588, %v589
    %v591 = vmul.f32 %v590, %v464
    %v592 = vmul.f32 %v576, %v576
    %v593 = vmul.f32 %v581, %v581
    %v594 = vadd.f32 %v592, %v593
    %v595 = vrot.slane %v594, 4
    %v596 = vadd.f32 %v594, %v595
    %v597 = vrot.slane %v596, 2
    %v598 = vadd.f32 %v596, %v597
    %v599 = vrot.slane %v598, 1
    %v600 = vadd.f32 %v598, %v599
    %v601 = vmul.f32 %v600, %v464
    %v602 = vmul.f32 %v591, %v591
    %v603 = vsub.f32 %v601, %v602
    %v604 = vmax.f32 %v603, 0.0
    %v605 = vsub.f32 %v576, %v591
    %v606 = vsub.f32 %v581, %v591
    %v607 = vadd.f32 %v604, 1e-05
    %v608 = vrsqrt.pop %v607
    %v609 = vmul.f32 %v605, %v608
    %v610 = vmul.f32 %v606, %v608
    %v612 = vlaneseq
    %v613 = vshrl.u32 %v612, 7
    %v614 = vsub.s32 0, %v613
    %v615 = vrot.slane %v319, %v614
    %v617 = vmul.f32 %v609, %v615
    %v618 = vmul.f32 %v610, %v615
    %v620 = vlaneseq
    %v621 = vshrl.u32 %v620, 7
    %v622 = vsub.s32 0, %v621
    %v623 = vrot.slane %v320, %v622
    %v625 = vadd.f32 %v617, %v623
    %v626 = vadd.f32 %v618, %v623
    %v627 = vmax.f32 %v625, 0.0
    %v628 = vmax.f32 %v626, 0.0
    %v629 = vmax.f32 %v627, 0.0
    %v630 = vmax.f32 %v628, 0.0
    %631 = vadd.xlane.f32.xlu0 %v629
    %v632 = vpop.xlane.xlu0 %631
    %633 = vadd.xlane.f32.xlu0 %v630
    %v634 = vpop.xlane.xlu0 %633
    %v635 = vmul.f32 %v632, 0.03125
    %v636 = vmul.f32 %v634, 0.03125
    %v637 = vmul.f32 %v629, %v629
    %v638 = vmul.f32 %v630, %v630
    %639 = vadd.xlane.f32.xlu0 %v637
    %v640 = vpop.xlane.xlu0 %639
    %641 = vadd.xlane.f32.xlu0 %v638
    %v642 = vpop.xlane.xlu0 %641
    %v643 = vmul.f32 %v640, 0.03125
    %v644 = vmul.f32 %v642, 0.03125
    %v645 = vmul.f32 %v635, %v635
    %v646 = vmul.f32 %v636, %v636
    %v647 = vsub.f32 %v643, %v645
    %v648 = vsub.f32 %v644, %v646
    %v649 = vmax.f32 %v647, 0.0
    %v650 = vmax.f32 %v648, 0.0
    %v651 = vsub.f32 %v629, %v635
    %v652 = vsub.f32 %v630, %v636
    %v653 = vadd.f32 %v649, 1e-05
    %v654 = vadd.f32 %v650, 1e-05
    %v655 = vrsqrt.pop %v653
    %v656 = vrsqrt.pop %v654
    %v657 = vmul.f32 %v651, %v655
    %v658 = vmul.f32 %v652, %v656
    %v660 = vlaneseq
    %v661 = vshrl.u32 %v660, 7
    %v662 = vsub.s32 0, %v661
    %v663 = vrot.slane %v321, %v662
    %v665 = vmul.f32 %v657, %v663
    %v666 = vmul.f32 %v658, %v663
    %v668 = vlaneseq
    %v669 = vshrl.u32 %v668, 7
    %v670 = vsub.s32 0, %v669
    %v671 = vrot.slane %v322, %v670
    %v673 = vadd.f32 %v665, %v671
    %v674 = vadd.f32 %v666, %v671
    %s675 = scalar_lea.vmem [#allocation7], 128
    %v676 = vld [vmem:[%s675] sm:$0xff]
    %v677 = vld [vmem:[%s675 + $0x8] sm:$0xff]
    %v678 = vld [vmem:[%s675 + $0x10] sm:$0xff]
    %v679 = vld [vmem:[%s675 + $0x18] sm:$0xff]
    %v680 = vld [vmem:[%s675 + $0x20] sm:$0xff]
    %v681 = vld [vmem:[%s675 + $0x28] sm:$0xff]
    %v682 = vld [vmem:[%s675 + $0x30] sm:$0xff]
    %v683 = vld [vmem:[%s675 + $0x38] sm:$0xff]
    %v684 = vld [vmem:[%s675 + $0x40] sm:$0xff]
    %v685 = vld [vmem:[%s675 + $0x48] sm:$0xff]
    %v686 = vld [vmem:[%s675 + $0x50] sm:$0xff]
    %v687 = vld [vmem:[%s675 + $0x58] sm:$0xff]
    %v688 = vld [vmem:[%s675 + $0x60] sm:$0xff]
    %v689 = vld [vmem:[%s675 + $0x68] sm:$0xff]
    %v690 = vld [vmem:[%s675 + $0x70] sm:$0xff]
    %v691 = vld [vmem:[%s675 + $0x78] sm:$0xff]
    %s692 = scalar_lea.vmem %s6, 1
    %v693 = vld [vmem:[%s692] sm:$0x1]
    %s694 = scalar_lea.vmem %s7, 1
    %v695 = vld [vmem:[%s694] sm:$0x1]
    %s696 = scalar_lea.vmem %s8, 1
    %v697 = vld [vmem:[%s696] sm:$0x1]
    %s698 = scalar_lea.vmem [#allocation8], 128
    %v699 = vld [vmem:[%s698] sm:$0xff]
    %v700 = vld [vmem:[%s698 + $0x8] sm:$0xff]
    %v701 = vld [vmem:[%s698 + $0x10] sm:$0xff]
    %v702 = vld [vmem:[%s698 + $0x18] sm:$0xff]
    %v703 = vld [vmem:[%s698 + $0x20] sm:$0xff]
    %v704 = vld [vmem:[%s698 + $0x28] sm:$0xff]
    %v705 = vld [vmem:[%s698 + $0x30] sm:$0xff]
    %v706 = vld [vmem:[%s698 + $0x38] sm:$0xff]
    %v707 = vld [vmem:[%s698 + $0x40] sm:$0xff]
    %v708 = vld [vmem:[%s698 + $0x48] sm:$0xff]
    %v709 = vld [vmem:[%s698 + $0x50] sm:$0xff]
    %v710 = vld [vmem:[%s698 + $0x58] sm:$0xff]
    %v711 = vld [vmem:[%s698 + $0x60] sm:$0xff]
    %v712 = vld [vmem:[%s698 + $0x68] sm:$0xff]
    %v713 = vld [vmem:[%s698 + $0x70] sm:$0xff]
    %v714 = vld [vmem:[%s698 + $0x78] sm:$0xff]
    %s715 = scalar_lea.vmem %s10, 1
    %v716 = vld [vmem:[%s715] sm:$0x1]
    %s717 = scalar_lea.vmem %s11, 1
    %v718 = vld [vmem:[%s717] sm:$0x1]
    %s719 = scalar_lea.vmem %s12, 1
    %v720 = vld [vmem:[%s719] sm:$0x1]
    %s721 = scalar_lea.vmem %s13, 1
    %v722 = vld [vmem:[%s721] sm:$0x1]
    %s723 = scalar_lea.vmem %s14, 1
    %v724 = vld [vmem:[%s723] sm:$0x1]
    %v725 = vpack.c.bf16 %v674, %v673
    %726 = vmatprep.subr.bf16.mxu0 0
    %727 = vmatpush1.bf16.msra.mxu0 %v725
    %728 = vmatprep.subr.bf16.mxu0 0
    %729 = vmatpush1.bf16.msra.mxu0 0
    %730 = vmatprep.subr.bf16.mxu0 0
    %731 = vmatpush1.bf16.msra.mxu0 0
    %732 = vmatprep.subr.bf16.mxu0 0
    %733 = vmatpush1.bf16.msra.mxu0 0
    %734 = vmatprep.subr.bf16.mxu0 0
    %735 = vmatpush1.bf16.msra.mxu0 0
    %736 = vmatprep.subr.bf16.mxu0 0
    %737 = vmatpush1.bf16.msra.mxu0 0
    %738 = vmatprep.subr.bf16.mxu0 0
    %739 = vmatpush1.bf16.msra.mxu0 0
    %740 = vmatprep.subr.bf16.mxu0 0
    %741 = vmatpush1.bf16.msra.mxu0 0
    %742 = vmatprep.subr.bf16.mxu0 0
    %743 = vmatpush1.bf16.msra.mxu0 0
    %744 = vmatprep.subr.bf16.mxu0 0
    %745 = vmatpush1.bf16.msra.mxu0 0
    %746 = vmatprep.subr.bf16.mxu0 0
    %747 = vmatpush1.bf16.msra.mxu0 0
    %748 = vmatprep.subr.bf16.mxu0 0
    %749 = vmatpush1.bf16.msra.mxu0 0
    %750 = vmatprep.subr.bf16.mxu0 0
    %751 = vmatpush1.bf16.msra.mxu0 0
    %752 = vmatprep.subr.bf16.mxu0 0
    %753 = vmatpush1.bf16.msra.mxu0 0
    %754 = vmatprep.subr.bf16.mxu0 0
    %755 = vmatpush1.bf16.msra.mxu0 0
    %756 = vmatprep.subr.bf16.mxu0 0
    %757 = vmatpush1.bf16.msra.mxu0 0
    %758 = vmatprep.mubr.bf16.mxu0 0
    %759 = vmatmul.mubr.bf16.gmra.mrb[0].mxu0 %v331
    %v760 = vpop.f32.mrb[0].mxu0
    %v761 = vadd.f32 0.0, %v760
    %v762 = vpop.f32.mrb[0].mxu0
    %v763 = vpop.f32.mrb[0].mxu0
    %v764 = vadd.f32 0.0, %v763
    %v765 = vpop.f32.mrb[0].mxu0
    %766 = vdwg.mxu0
    %v767 = vadd.f32 %v673, %v761
    %v768 = vadd.f32 %v674, %v764
    %v770 = vlaneseq
    %v771 = vshrl.u32 %v770, 7
    %v772 = vsub.s32 0, %v771
    %v773 = vrot.slane %v693, %v772
    %775 = vmatprep.subr.mxu0 0.0
    %776 = vmatpush1.msra.mxu0 %v676
    %777 = vmatprep.subr.mxu0 0.0
    %778 = vmatpush1.msra.mxu0 %v677
    %779 = vmatprep.subr.mxu0 0.0
    %780 = vmatpush1.msra.mxu0 %v678
    %781 = vmatprep.subr.mxu0 0.0
    %782 = vmatpush1.msra.mxu0 %v679
    %783 = vmatprep.subr.mxu0 0.0
    %784 = vmatpush1.msra.mxu0 %v680
    %785 = vmatprep.subr.mxu0 0.0
    %786 = vmatpush1.msra.mxu0 %v681
    %787 = vmatprep.subr.mxu0 0.0
    %788 = vmatpush1.msra.mxu0 %v682
    %789 = vmatprep.subr.mxu0 0.0
    %790 = vmatpush1.msra.mxu0 %v683
    %791 = vmatprep.subr.mxu0 0.0
    %792 = vmatpush1.msra.mxu0 %v684
    %793 = vmatprep.subr.mxu0 0.0
    %794 = vmatpush1.msra.mxu0 %v685
    %795 = vmatprep.subr.mxu0 0.0
    %796 = vmatpush1.msra.mxu0 %v686
    %797 = vmatprep.subr.mxu0 0.0
    %798 = vmatpush1.msra.mxu0 %v687
    %799 = vmatprep.subr.mxu0 0.0
    %800 = vmatpush1.msra.mxu0 %v688
    %801 = vmatprep.subr.mxu0 0.0
    %802 = vmatpush1.msra.mxu0 %v689
    %803 = vmatprep.subr.mxu0 0.0
    %804 = vmatpush1.msra.mxu0 %v690
    %805 = vmatprep.subr.mxu0 0.0
    %806 = vmatpush1.msra.mxu0 %v691
    %807 = vmatprep.subr.mxu0 0.0
    %808 = vmatpush1.msra.mxu0 0.0
    %809 = vmatprep.subr.mxu0 0.0
    %810 = vmatpush1.msra.mxu0 0.0
    %811 = vmatprep.subr.mxu0 0.0
    %812 = vmatpush1.msra.mxu0 0.0
    %813 = vmatprep.subr.mxu0 0.0
    %814 = vmatpush1.msra.mxu0 0.0
    %815 = vmatprep.subr.mxu0 0.0
    %816 = vmatpush1.msra.mxu0 0.0
    %817 = vmatprep.subr.mxu0 0.0
    %818 = vmatpush1.msra.mxu0 0.0
    %819 = vmatprep.subr.mxu0 0.0
    %820 = vmatpush1.msra.mxu0 0.0
    %821 = vmatprep.subr.mxu0 0.0
    %822 = vmatpush1.msra.mxu0 0.0
    %823 = vmatprep.subr.mxu0 0.0
    %824 = vmatpush1.msra.mxu0 0.0
    %825 = vmatprep.subr.mxu0 0.0
    %826 = vmatpush1.msra.mxu0 0.0
    %827 = vmatprep.subr.mxu0 0.0
    %828 = vmatpush1.msra.mxu0 0.0
    %829 = vmatprep.subr.mxu0 0.0
    %830 = vmatpush1.msra.mxu0 0.0
    %831 = vmatprep.subr.mxu0 0.0
    %832 = vmatpush1.msra.mxu0 0.0
    %833 = vmatprep.subr.mxu0 0.0
    %834 = vmatpush1.msra.mxu0 0.0
    %835 = vmatprep.subr.mxu0 0.0
    %836 = vmatpush1.msra.mxu0 0.0
    %837 = vmatprep.subr.mxu0 0.0
    %838 = vmatpush1.msra.mxu0 0.0
    %839 = vmatprep.mubr.f32.mxu0 0.0
    %840 = vmatmul.mubr.f32.gmra.mrb[0].mxu0 %v767
    %v841 = vpop.f32.mrb[0].mxu0
    %v842 = vadd.f32 %v773, %v841
    %v843 = vpop.f32.mrb[0].mxu0
    %844 = vmatprep.mubr.f32.mxu0 0.0
    %845 = vmatmul.mubr.f32.gmra.mrb[0].mxu0 %v768
    %v846 = vpop.f32.mrb[0].mxu0
    %v847 = vadd.f32 %v773, %v846
    %v848 = vpop.f32.mrb[0].mxu0
    %849 = vdwg.mxu0
    %v850 = vadd.f32 %v842, %v847
    %v851 = vrot.slane %v850, 4
    %v852 = vadd.f32 %v850, %v851
    %v853 = vrot.slane %v852, 2
    %v854 = vadd.f32 %v852, %v853
    %v855 = vrot.slane %v854, 1
    %v856 = vadd.f32 %v854, %v855
    %v857 = vmul.f32 %v856, %v464
    %v858 = vmul.f32 %v842, %v842
    %v859 = vmul.f32 %v847, %v847
    %v860 = vadd.f32 %v858, %v859
    %v861 = vrot.slane %v860, 4
    %v862 = vadd.f32 %v860, %v861
    %v863 = vrot.slane %v862, 2
    %v864 = vadd.f32 %v862, %v863
    %v865 = vrot.slane %v864, 1
    %v866 = vadd.f32 %v864, %v865
    %v867 = vmul.f32 %v866, %v464
    %v868 = vmul.f32 %v857, %v857
    %v869 = vsub.f32 %v867, %v868
    %v870 = vmax.f32 %v869, 0.0
    %v871 = vsub.f32 %v842, %v857
    %v872 = vsub.f32 %v847, %v857
    %v873 = vadd.f32 %v870, 1e-05
    %v874 = vrsqrt.pop %v873
    %v875 = vmul.f32 %v871, %v874
    %v876 = vmul.f32 %v872, %v874
    %v878 = vlaneseq
    %v879 = vshrl.u32 %v878, 7
    %v880 = vsub.s32 0, %v879
    %v881 = vrot.slane %v695, %v880
    %v883 = vmul.f32 %v875, %v881
    %v884 = vmul.f32 %v876, %v881
    %v886 = vlaneseq
    %v887 = vshrl.u32 %v886, 7
    %v888 = vsub.s32 0, %v887
    %v889 = vrot.slane %v697, %v888
    %v891 = vadd.f32 %v883, %v889
    %v892 = vadd.f32 %v884, %v889
    %v893 = vmax.f32 %v891, 0.0
    %v894 = vmax.f32 %v892, 0.0
    %v896 = vlaneseq
    %v897 = vshrl.u32 %v896, 7
    %v898 = vsub.s32 0, %v897
    %v899 = vrot.slane %v716, %v898
    %901 = vmatprep.subr.mxu0 0.0
    %902 = vmatpush1.msra.mxu0 %v699
    %903 = vmatprep.subr.mxu0 0.0
    %904 = vmatpush1.msra.mxu0 %v700
    %905 = vmatprep.subr.mxu0 0.0
    %906 = vmatpush1.msra.mxu0 %v701
    %907 = vmatprep.subr.mxu0 0.0
    %908 = vmatpush1.msra.mxu0 %v702
    %909 = vmatprep.subr.mxu0 0.0
    %910 = vmatpush1.msra.mxu0 %v703
    %911 = vmatprep.subr.mxu0 0.0
    %912 = vmatpush1.msra.mxu0 %v704
    %913 = vmatprep.subr.mxu0 0.0
    %914 = vmatpush1.msra.mxu0 %v705
    %915 = vmatprep.subr.mxu0 0.0
    %916 = vmatpush1.msra.mxu0 %v706
    %917 = vmatprep.subr.mxu0 0.0
    %918 = vmatpush1.msra.mxu0 %v707
    %919 = vmatprep.subr.mxu0 0.0
    %920 = vmatpush1.msra.mxu0 %v708
    %921 = vmatprep.subr.mxu0 0.0
    %922 = vmatpush1.msra.mxu0 %v709
    %923 = vmatprep.subr.mxu0 0.0
    %924 = vmatpush1.msra.mxu0 %v710
    %925 = vmatprep.subr.mxu0 0.0
    %926 = vmatpush1.msra.mxu0 %v711
    %927 = vmatprep.subr.mxu0 0.0
    %928 = vmatpush1.msra.mxu0 %v712
    %929 = vmatprep.subr.mxu0 0.0
    %930 = vmatpush1.msra.mxu0 %v713
    %931 = vmatprep.subr.mxu0 0.0
    %932 = vmatpush1.msra.mxu0 %v714
    %933 = vmatprep.subr.mxu0 0.0
    %934 = vmatpush1.msra.mxu0 0.0
    %935 = vmatprep.subr.mxu0 0.0
    %936 = vmatpush1.msra.mxu0 0.0
    %937 = vmatprep.subr.mxu0 0.0
    %938 = vmatpush1.msra.mxu0 0.0
    %939 = vmatprep.subr.mxu0 0.0
    %940 = vmatpush1.msra.mxu0 0.0
    %941 = vmatprep.subr.mxu0 0.0
    %942 = vmatpush1.msra.mxu0 0.0
    %943 = vmatprep.subr.mxu0 0.0
    %944 = vmatpush1.msra.mxu0 0.0
    %945 = vmatprep.subr.mxu0 0.0
    %946 = vmatpush1.msra.mxu0 0.0
    %947 = vmatprep.subr.mxu0 0.0
    %948 = vmatpush1.msra.mxu0 0.0
    %949 = vmatprep.subr.mxu0 0.0
    %950 = vmatpush1.msra.mxu0 0.0
    %951 = vmatprep.subr.mxu0 0.0
    %952 = vmatpush1.msra.mxu0 0.0
    %953 = vmatprep.subr.mxu0 0.0
    %954 = vmatpush1.msra.mxu0 0.0
    %955 = vmatprep.subr.mxu0 0.0
    %956 = vmatpush1.msra.mxu0 0.0
    %957 = vmatprep.subr.mxu0 0.0
    %958 = vmatpush1.msra.mxu0 0.0
    %959 = vmatprep.subr.mxu0 0.0
    %960 = vmatpush1.msra.mxu0 0.0
    %961 = vmatprep.subr.mxu0 0.0
    %962 = vmatpush1.msra.mxu0 0.0
    %963 = vmatprep.subr.mxu0 0.0
    %964 = vmatpush1.msra.mxu0 0.0
    %965 = vmatprep.mubr.f32.mxu0 0.0
    %966 = vmatmul.mubr.f32.gmra.mrb[0].mxu0 %v893
    %v967 = vpop.f32.mrb[0].mxu0
    %v968 = vadd.f32 %v899, %v967
    %v969 = vpop.f32.mrb[0].mxu0
    %970 = vmatprep.mubr.f32.mxu0 0.0
    %971 = vmatmul.mubr.f32.gmra.mrb[0].mxu0 %v894
    %v972 = vpop.f32.mrb[0].mxu0
    %v973 = vadd.f32 %v899, %v972
    %v974 = vpop.f32.mrb[0].mxu0
    %975 = vdwg.mxu0
    %v976 = vadd.f32 %v968, %v973
    %v977 = vrot.slane %v976, 4
    %v978 = vadd.f32 %v976, %v977
    %v979 = vrot.slane %v978, 2
    %v980 = vadd.f32 %v978, %v979
    %v981 = vrot.slane %v980, 1
    %v982 = vadd.f32 %v980, %v981
    %v983 = vmul.f32 %v982, %v464
    %v984 = vmul.f32 %v968, %v968
    %v985 = vmul.f32 %v973, %v973
    %v986 = vadd.f32 %v984, %v985
    %v987 = vrot.slane %v986, 4
    %v988 = vadd.f32 %v986, %v987
    %v989 = vrot.slane %v988, 2
    %v990 = vadd.f32 %v988, %v989
    %v991 = vrot.slane %v990, 1
    %v992 = vadd.f32 %v990, %v991
    %v993 = vmul.f32 %v992, %v464
    %v994 = vmul.f32 %v983, %v983
    %v995 = vsub.f32 %v993, %v994
    %v996 = vmax.f32 %v995, 0.0
    %v997 = vsub.f32 %v968, %v983
    %v998 = vsub.f32 %v973, %v983
    %v999 = vadd.f32 %v996, 1e-05
    %v1000 = vrsqrt.pop %v999
    %v1001 = vmul.f32 %v997, %v1000
    %v1002 = vmul.f32 %v998, %v1000
    %v1004 = vlaneseq
    %v1005 = vshrl.u32 %v1004, 7
    %v1006 = vsub.s32 0, %v1005
    %v1007 = vrot.slane %v718, %v1006
    %v1009 = vmul.f32 %v1001, %v1007
    %v1010 = vmul.f32 %v1002, %v1007
    %v1012 = vlaneseq
    %v1013 = vshrl.u32 %v1012, 7
    %v1014 = vsub.s32 0, %v1013
    %v1015 = vrot.slane %v720, %v1014
    %v1017 = vadd.f32 %v1009, %v1015
    %v1018 = vadd.f32 %v1010, %v1015
    %v1019 = vmax.f32 %v1017, 0.0
    %v1020 = vmax.f32 %v1018, 0.0
    %v1021 = vmax.f32 %v1019, 0.0
    %v1022 = vmax.f32 %v1020, 0.0
    %1023 = vadd.xlane.f32.xlu0 %v1021
    %v1024 = vpop.xlane.xlu0 %1023
    %1025 = vadd.xlane.f32.xlu0 %v1022
    %v1026 = vpop.xlane.xlu0 %1025
    %v1027 = vmul.f32 %v1024, 0.03125
    %v1028 = vmul.f32 %v1026, 0.03125
    %v1029 = vmul.f32 %v1021, %v1021
    %v1030 = vmul.f32 %v1022, %v1022
    %1031 = vadd.xlane.f32.xlu0 %v1029
    %v1032 = vpop.xlane.xlu0 %1031
    %1033 = vadd.xlane.f32.xlu0 %v1030
    %v1034 = vpop.xlane.xlu0 %1033
    %v1035 = vmul.f32 %v1032, 0.03125
    %v1036 = vmul.f32 %v1034, 0.03125
    %v1037 = vmul.f32 %v1027, %v1027
    %v1038 = vmul.f32 %v1028, %v1028
    %v1039 = vsub.f32 %v1035, %v1037
    %v1040 = vsub.f32 %v1036, %v1038
    %v1041 = vmax.f32 %v1039, 0.0
    %v1042 = vmax.f32 %v1040, 0.0
    %v1043 = vsub.f32 %v1021, %v1027
    %v1044 = vsub.f32 %v1022, %v1028
    %v1045 = vadd.f32 %v1041, 1e-05
    %v1046 = vadd.f32 %v1042, 1e-05
    %v1047 = vrsqrt.pop %v1045
    %v1048 = vrsqrt.pop %v1046
    %v1049 = vmul.f32 %v1043, %v1047
    %v1050 = vmul.f32 %v1044, %v1048
    %v1052 = vlaneseq
    %v1053 = vshrl.u32 %v1052, 7
    %v1054 = vsub.s32 0, %v1053
    %v1055 = vrot.slane %v722, %v1054
    %v1057 = vmul.f32 %v1049, %v1055
    %v1058 = vmul.f32 %v1050, %v1055
    %v1060 = vlaneseq
    %v1061 = vshrl.u32 %v1060, 7
    %v1062 = vsub.s32 0, %v1061
    %v1063 = vrot.slane %v724, %v1062
    %v1065 = vadd.f32 %v1057, %v1063
    %v1066 = vadd.f32 %v1058, %v1063
    %v1069 = vcombine.high %v1065, %v1065
    %v1071 = vunpack.c.l.s4 1966171168
    %v1072 = vunpack.c.0.s8 %v1071
    %v1073 = vlaneseq
    %v1074 = vshrl.u32 %v1073, 7
    %v1075 = vsub.s32 %v1072, %v1074
    %v1076 = vrot.slane %v1065, %v1075
    %v1078 = vunpack.c.l.s4 1966171168
    %v1079 = vunpack.c.0.s8 %v1078
    %v1080 = vlaneseq
    %v1081 = vshrl.u32 %v1080, 7
    %v1082 = vsub.s32 %v1079, %v1081
    %v1083 = vrot.slane %v1069, %v1082
    %v1084 = vcombine.high %v1076, %v1076
    %v1085 = vcombine.high %v1083, %v1083
    %v1087 = vunpack.c.l.s4 1966171168
    %v1088 = vunpack.c.0.s8 %v1087
    %v1089 = vlaneseq
    %v1090 = vshrl.u32 %v1089, 7
    %v1091 = vsub.s32 %v1088, %v1090
    %v1092 = vrot.slane %v1076, %v1091
    %v1094 = vunpack.c.l.s4 1966171168
    %v1095 = vunpack.c.0.s8 %v1094
    %v1096 = vlaneseq
    %v1097 = vshrl.u32 %v1096, 7
    %v1098 = vsub.s32 %v1095, %v1097
    %v1099 = vrot.slane %v1083, %v1098
    %v1101 = vunpack.c.l.s4 1966171168
    %v1102 = vunpack.c.0.s8 %v1101
    %v1103 = vlaneseq
    %v1104 = vshrl.u32 %v1103, 7
    %v1105 = vsub.s32 %v1102, %v1104
    %v1106 = vrot.slane %v1084, %v1105
    %v1108 = vunpack.c.l.s4 1966171168
    %v1109 = vunpack.c.0.s8 %v1108
    %v1110 = vlaneseq
    %v1111 = vshrl.u32 %v1110, 7
    %v1112 = vsub.s32 %v1109, %v1111
    %v1113 = vrot.slane %v1085, %v1112
    %v1114 = vcombine.high %v1092, %v1092
    %v1115 = vcombine.high %v1099, %v1099
    %v1116 = vcombine.high %v1106, %v1106
    %v1117 = vcombine.high %v1113, %v1113
    %v1118 = vcombine.high %v1066, %v1066
    %v1120 = vunpack.c.l.s4 1966171168
    %v1121 = vunpack.c.0.s8 %v1120
    %v1122 = vlaneseq
    %v1123 = vshrl.u32 %v1122, 7
    %v1124 = vsub.s32 %v1121, %v1123
    %v1125 = vrot.slane %v1066, %v1124
    %v1127 = vunpack.c.l.s4 1966171168
    %v1128 = vunpack.c.0.s8 %v1127
    %v1129 = vlaneseq
    %v1130 = vshrl.u32 %v1129, 7
    %v1131 = vsub.s32 %v1128, %v1130
    %v1132 = vrot.slane %v1118, %v1131
    %v1133 = vcombine.high %v1125, %v1125
    %v1134 = vcombine.high %v1132, %v1132
    %v1136 = vunpack.c.l.s4 1966171168
    %v1137 = vunpack.c.0.s8 %v1136
    %v1138 = vlaneseq
    %v1139 = vshrl.u32 %v1138, 7
    %v1140 = vsub.s32 %v1137, %v1139
    %v1141 = vrot.slane %v1125, %v1140
    %v1143 = vunpack.c.l.s4 1966171168
    %v1144 = vunpack.c.0.s8 %v1143
    %v1145 = vlaneseq
    %v1146 = vshrl.u32 %v1145, 7
    %v1147 = vsub.s32 %v1144, %v1146
    %v1148 = vrot.slane %v1132, %v1147
    %v1150 = vunpack.c.l.s4 1966171168
    %v1151 = vunpack.c.0.s8 %v1150
    %v1152 = vlaneseq
    %v1153 = vshrl.u32 %v1152, 7
    %v1154 = vsub.s32 %v1151, %v1153
    %v1155 = vrot.slane %v1133, %v1154
    %v1157 = vunpack.c.l.s4 1966171168
    %v1158 = vunpack.c.0.s8 %v1157
    %v1159 = vlaneseq
    %v1160 = vshrl.u32 %v1159, 7
    %v1161 = vsub.s32 %v1158, %v1160
    %v1162 = vrot.slane %v1134, %v1161
    %v1163 = vcombine.high %v1141, %v1141
    %v1164 = vcombine.high %v1148, %v1148
    %v1165 = vcombine.high %v1155, %v1155
    %v1166 = vcombine.high %v1162, %v1162
    %v1167 = vlaneseq
    %v1168 = vshrl.u32 %v1167, 7
    %v1169 = vsub.s32 0, %v1168
    %v1170 = vrot.slane %v181, %v1169
    %1172 = vbcast.lane.b32.xlu0 %v1170, 256
    %v1173 = vpop.permute.xlu0 %1172
    %v1174 = vlaneseq
    %v1175 = vshrl.u32 %v1174, 7
    %v1176 = vsub.s32 1, %v1175
    %v1177 = vrot.slane %v181, %v1176
    %1179 = vbcast.lane.b32.xlu0 %v1177, 256
    %v1180 = vpop.permute.xlu0 %1179
    %v1181 = vlaneseq
    %v1182 = vshrl.u32 %v1181, 7
    %v1183 = vsub.s32 2, %v1182
    %v1184 = vrot.slane %v181, %v1183
    %1186 = vbcast.lane.b32.xlu0 %v1184, 256
    %v1187 = vpop.permute.xlu0 %1186
    %v1188 = vlaneseq
    %v1189 = vshrl.u32 %v1188, 7
    %v1190 = vsub.s32 3, %v1189
    %v1191 = vrot.slane %v181, %v1190
    %1193 = vbcast.lane.b32.xlu0 %v1191, 256
    %v1194 = vpop.permute.xlu0 %1193
    %v1195 = vlaneseq
    %v1196 = vshrl.u32 %v1195, 7
    %v1197 = vsub.s32 4, %v1196
    %v1198 = vrot.slane %v181, %v1197
    %1200 = vbcast.lane.b32.xlu0 %v1198, 256
    %v1201 = vpop.permute.xlu0 %1200
    %v1202 = vlaneseq
    %v1203 = vshrl.u32 %v1202, 7
    %v1204 = vsub.s32 5, %v1203
    %v1205 = vrot.slane %v181, %v1204
    %1207 = vbcast.lane.b32.xlu0 %v1205, 256
    %v1208 = vpop.permute.xlu0 %1207
    %v1209 = vlaneseq
    %v1210 = vshrl.u32 %v1209, 7
    %v1211 = vsub.s32 6, %v1210
    %v1212 = vrot.slane %v181, %v1211
    %1214 = vbcast.lane.b32.xlu0 %v1212, 256
    %v1215 = vpop.permute.xlu0 %1214
    %v1216 = vlaneseq
    %v1217 = vshrl.u32 %v1216, 7
    %v1218 = vsub.s32 7, %v1217
    %v1219 = vrot.slane %v181, %v1218
    %1221 = vbcast.lane.b32.xlu0 %v1219, 256
    %v1222 = vpop.permute.xlu0 %1221
    %v1223 = vlaneseq
    %v1224 = vshrl.u32 %v1223, 7
    %v1225 = vsub.s32 0, %v1224
    %v1226 = vrot.slane %v182, %v1225
    %1228 = vbcast.lane.b32.xlu0 %v1226, 256
    %v1229 = vpop.permute.xlu0 %1228
    %v1230 = vlaneseq
    %v1231 = vshrl.u32 %v1230, 7
    %v1232 = vsub.s32 1, %v1231
    %v1233 = vrot.slane %v182, %v1232
    %1235 = vbcast.lane.b32.xlu0 %v1233, 256
    %v1236 = vpop.permute.xlu0 %1235
    %v1237 = vlaneseq
    %v1238 = vshrl.u32 %v1237, 7
    %v1239 = vsub.s32 2, %v1238
    %v1240 = vrot.slane %v182, %v1239
    %1242 = vbcast.lane.b32.xlu0 %v1240, 256
    %v1243 = vpop.permute.xlu0 %1242
    %v1244 = vlaneseq
    %v1245 = vshrl.u32 %v1244, 7
    %v1246 = vsub.s32 3, %v1245
    %v1247 = vrot.slane %v182, %v1246
    %1249 = vbcast.lane.b32.xlu0 %v1247, 256
    %v1250 = vpop.permute.xlu0 %1249
    %v1251 = vlaneseq
    %v1252 = vshrl.u32 %v1251, 7
    %v1253 = vsub.s32 4, %v1252
    %v1254 = vrot.slane %v182, %v1253
    %1256 = vbcast.lane.b32.xlu0 %v1254, 256
    %v1257 = vpop.permute.xlu0 %1256
    %v1258 = vlaneseq
    %v1259 = vshrl.u32 %v1258, 7
    %v1260 = vsub.s32 5, %v1259
    %v1261 = vrot.slane %v182, %v1260
    %1263 = vbcast.lane.b32.xlu0 %v1261, 256
    %v1264 = vpop.permute.xlu0 %1263
    %v1265 = vlaneseq
    %v1266 = vshrl.u32 %v1265, 7
    %v1267 = vsub.s32 6, %v1266
    %v1268 = vrot.slane %v182, %v1267
    %1270 = vbcast.lane.b32.xlu0 %v1268, 256
    %v1271 = vpop.permute.xlu0 %1270
    %v1272 = vlaneseq
    %v1273 = vshrl.u32 %v1272, 7
    %v1274 = vsub.s32 7, %v1273
    %v1275 = vrot.slane %v182, %v1274
    %1277 = vbcast.lane.b32.xlu0 %v1275, 256
    %v1278 = vpop.permute.xlu0 %1277
    %v1279 = vlaneseq
    %v1280 = vshrl.u32 %v1279, 7
    %v1281 = vsub.s32 0, %v1280
    %v1282 = vrot.slane %v1092, %v1281
    %v1283 = vlaneseq
    %v1284 = vshrl.u32 %v1283, 7
    %v1285 = vsub.s32 0, %v1284
    %v1286 = vrot.slane %v1106, %v1285
    %v1287 = vlaneseq
    %v1288 = vshrl.u32 %v1287, 7
    %v1289 = vsub.s32 0, %v1288
    %v1290 = vrot.slane %v1114, %v1289
    %v1291 = vlaneseq
    %v1292 = vshrl.u32 %v1291, 7
    %v1293 = vsub.s32 0, %v1292
    %v1294 = vrot.slane %v1116, %v1293
    %v1295 = vlaneseq
    %v1296 = vshrl.u32 %v1295, 7
    %v1297 = vsub.s32 0, %v1296
    %v1298 = vrot.slane %v1099, %v1297
    %v1299 = vlaneseq
    %v1300 = vshrl.u32 %v1299, 7
    %v1301 = vsub.s32 0, %v1300
    %v1302 = vrot.slane %v1113, %v1301
    %v1303 = vlaneseq
    %v1304 = vshrl.u32 %v1303, 7
    %v1305 = vsub.s32 0, %v1304
    %v1306 = vrot.slane %v1115, %v1305
    %v1307 = vlaneseq
    %v1308 = vshrl.u32 %v1307, 7
    %v1309 = vsub.s32 0, %v1308
    %v1310 = vrot.slane %v1117, %v1309
    %v1311 = vlaneseq
    %v1312 = vshrl.u32 %v1311, 7
    %v1313 = vsub.s32 0, %v1312
    %v1314 = vrot.slane %v1141, %v1313
    %v1315 = vlaneseq
    %v1316 = vshrl.u32 %v1315, 7
    %v1317 = vsub.s32 0, %v1316
    %v1318 = vrot.slane %v1155, %v1317
    %v1319 = vlaneseq
    %v1320 = vshrl.u32 %v1319, 7
    %v1321 = vsub.s32 0, %v1320
    %v1322 = vrot.slane %v1163, %v1321
    %v1323 = vlaneseq
    %v1324 = vshrl.u32 %v1323, 7
    %v1325 = vsub.s32 0, %v1324
    %v1326 = vrot.slane %v1165, %v1325
    %v1327 = vlaneseq
    %v1328 = vshrl.u32 %v1327, 7
    %v1329 = vsub.s32 0, %v1328
    %v1330 = vrot.slane %v1148, %v1329
    %v1331 = vlaneseq
    %v1332 = vshrl.u32 %v1331, 7
    %v1333 = vsub.s32 0, %v1332
    %v1334 = vrot.slane %v1162, %v1333
    %v1335 = vlaneseq
    %v1336 = vshrl.u32 %v1335, 7
    %v1337 = vsub.s32 0, %v1336
    %v1338 = vrot.slane %v1164, %v1337
    %v1339 = vlaneseq
    %v1340 = vshrl.u32 %v1339, 7
    %v1341 = vsub.s32 0, %v1340
    %v1342 = vrot.slane %v1166, %v1341
    %v1359 = vadd.f32 %v1282, %v1173
    %v1360 = vadd.f32 %v1286, %v1180
    %v1361 = vadd.f32 %v1290, %v1187
    %v1362 = vadd.f32 %v1294, %v1194
    %v1363 = vadd.f32 %v1298, %v1201
    %v1364 = vadd.f32 %v1302, %v1208
    %v1365 = vadd.f32 %v1306, %v1215
    %v1366 = vadd.f32 %v1310, %v1222
    %v1367 = vadd.f32 %v1314, %v1229
    %v1368 = vadd.f32 %v1318, %v1236
    %v1369 = vadd.f32 %v1322, %v1243
    %v1370 = vadd.f32 %v1326, %v1250
    %v1371 = vadd.f32 %v1330, %v1257
    %v1372 = vadd.f32 %v1334, %v1264
    %v1373 = vadd.f32 %v1338, %v1271
    %v1374 = vadd.f32 %v1342, %v1278
    %vm1375 = vcmask 1041408
    %v1376 = vsel %vm1375, %v1359, -inf
    %v1377 = vsel %vm1375, %v1360, -inf
    %v1378 = vsel %vm1375, %v1361, -inf
    %v1379 = vsel %vm1375, %v1362, -inf
    %v1380 = vsel %vm1375, %v1363, -inf
    %v1381 = vmax.f32 %v1376, %v1380
    %v1382 = vsel %vm1375, %v1364, -inf
    %v1383 = vmax.f32 %v1377, %v1382
    %v1384 = vsel %vm1375, %v1365, -inf
    %v1385 = vmax.f32 %v1378, %v1384
    %v1386 = vsel %vm1375, %v1366, -inf
    %v1387 = vmax.f32 %v1379, %v1386
    %v1388 = vsel %vm1375, %v1367, -inf
    %v1389 = vmax.f32 %v1381, %v1388
    %v1390 = vsel %vm1375, %v1368, -inf
    %v1391 = vmax.f32 %v1383, %v1390
    %v1392 = vsel %vm1375, %v1369, -inf
    %v1393 = vmax.f32 %v1385, %v1392
    %v1394 = vsel %vm1375, %v1370, -inf
    %v1395 = vmax.f32 %v1387, %v1394
    %v1396 = vsel %vm1375, %v1371, -inf
    %v1397 = vmax.f32 %v1389, %v1396
    %v1398 = vsel %vm1375, %v1372, -inf
    %v1399 = vmax.f32 %v1391, %v1398
    %v1400 = vsel %vm1375, %v1373, -inf
    %v1401 = vmax.f32 %v1393, %v1400
    %v1402 = vsel %vm1375, %v1374, -inf
    %v1403 = vmax.f32 %v1395, %v1402
    %v1404 = vmax.f32 %v1397, %v1399
    %v1405 = vmax.f32 %v1401, %v1403
    %v1406 = vmax.f32 %v1404, %v1405
    %v1407 = vld [vmem:[#allocation10] sm:$0xff]
    %v1408 = vld [vmem:[#allocation10 + $0x8] sm:$0xff]
    %v1409 = vld [vmem:[#allocation10 + $0x10] sm:$0xff]
    %v1410 = vld [vmem:[#allocation10 + $0x18] sm:$0xff]
    %v1411 = vld [vmem:[#allocation10 + $0x20] sm:$0xff]
    %v1412 = vld [vmem:[#allocation10 + $0x28] sm:$0xff]
    %v1413 = vld [vmem:[#allocation10 + $0x30] sm:$0xff]
    %v1414 = vld [vmem:[#allocation10 + $0x38] sm:$0xff]
    %v1415 = vld [vmem:[#allocation10 + $0x40] sm:$0xff]
    %v1416 = vld [vmem:[#allocation10 + $0x48] sm:$0xff]
    %v1417 = vld [vmem:[#allocation10 + $0x50] sm:$0xff]
    %v1418 = vld [vmem:[#allocation10 + $0x58] sm:$0xff]
    %v1419 = vld [vmem:[#allocation10 + $0x60] sm:$0xff]
    %v1420 = vld [vmem:[#allocation10 + $0x68] sm:$0xff]
    %v1421 = vld [vmem:[#allocation10 + $0x70] sm:$0xff]
    %v1422 = vld [vmem:[#allocation10 + $0x78] sm:$0xff]
    %v1423 = vld [vmem:[%s16] sm:$0x1]
    %v1425 = vlaneseq
    %v1426 = vshrl.u32 %v1425, 7
    %v1427 = vsub.s32 0, %v1426
    %v1428 = vrot.slane %v1423, %v1427
    %1430 = vmatprep.subr.mxu0 0.0
    %1431 = vmatpush1.msra.mxu0 %v1407
    %1432 = vmatprep.subr.mxu0 0.0
    %1433 = vmatpush1.msra.mxu0 %v1408
    %1434 = vmatprep.subr.mxu0 0.0
    %1435 = vmatpush1.msra.mxu0 %v1409
    %1436 = vmatprep.subr.mxu0 0.0
    %1437 = vmatpush1.msra.mxu0 %v1410
    %1438 = vmatprep.subr.mxu0 0.0
    %1439 = vmatpush1.msra.mxu0 %v1411
    %1440 = vmatprep.subr.mxu0 0.0
    %1441 = vmatpush1.msra.mxu0 %v1412
    %1442 = vmatprep.subr.mxu0 0.0
    %1443 = vmatpush1.msra.mxu0 %v1413
    %1444 = vmatprep.subr.mxu0 0.0
    %1445 = vmatpush1.msra.mxu0 %v1414
    %1446 = vmatprep.subr.mxu0 0.0
    %1447 = vmatpush1.msra.mxu0 %v1415
    %1448 = vmatprep.subr.mxu0 0.0
    %1449 = vmatpush1.msra.mxu0 %v1416
    %1450 = vmatprep.subr.mxu0 0.0
    %1451 = vmatpush1.msra.mxu0 %v1417
    %1452 = vmatprep.subr.mxu0 0.0
    %1453 = vmatpush1.msra.mxu0 %v1418
    %1454 = vmatprep.subr.mxu0 0.0
    %1455 = vmatpush1.msra.mxu0 %v1419
    %1456 = vmatprep.subr.mxu0 0.0
    %1457 = vmatpush1.msra.mxu0 %v1420
    %1458 = vmatprep.subr.mxu0 0.0
    %1459 = vmatpush1.msra.mxu0 %v1421
    %1460 = vmatprep.subr.mxu0 0.0
    %1461 = vmatpush1.msra.mxu0 %v1422
    %1462 = vmatprep.subr.mxu0 0.0
    %1463 = vmatpush1.msra.mxu0 0.0
    %1464 = vmatprep.subr.mxu0 0.0
    %1465 = vmatpush1.msra.mxu0 0.0
    %1466 = vmatprep.subr.mxu0 0.0
    %1467 = vmatpush1.msra.mxu0 0.0
    %1468 = vmatprep.subr.mxu0 0.0
    %1469 = vmatpush1.msra.mxu0 0.0
    %1470 = vmatprep.subr.mxu0 0.0
    %1471 = vmatpush1.msra.mxu0 0.0
    %1472 = vmatprep.subr.mxu0 0.0
    %1473 = vmatpush1.msra.mxu0 0.0
    %1474 = vmatprep.subr.mxu0 0.0
    %1475 = vmatpush1.msra.mxu0 0.0
    %1476 = vmatprep.subr.mxu0 0.0
    %1477 = vmatpush1.msra.mxu0 0.0
    %1478 = vmatprep.subr.mxu0 0.0
    %1479 = vmatpush1.msra.mxu0 0.0
    %1480 = vmatprep.subr.mxu0 0.0
    %1481 = vmatpush1.msra.mxu0 0.0
    %1482 = vmatprep.subr.mxu0 0.0
    %1483 = vmatpush1.msra.mxu0 0.0
    %1484 = vmatprep.subr.mxu0 0.0
    %1485 = vmatpush1.msra.mxu0 0.0
    %1486 = vmatprep.subr.mxu0 0.0
    %1487 = vmatpush1.msra.mxu0 0.0
    %1488 = vmatprep.subr.mxu0 0.0
    %1489 = vmatpush1.msra.mxu0 0.0
    %1490 = vmatprep.subr.mxu0 0.0
    %1491 = vmatpush1.msra.mxu0 0.0
    %1492 = vmatprep.subr.mxu0 0.0
    %1493 = vmatpush1.msra.mxu0 0.0
    %1494 = vmatprep.mubr.f32.mxu0 0.0
    %1495 = vmatmul.mubr.f32.gmra.mrb[0].mxu0 %v1406
    %v1496 = vpop.f32.mrb[0].mxu0
    %v1497 = vadd.f32 %v1428, %v1496
    %v1498 = vpop.f32.mrb[0].mxu0
    %1499 = vdwg.mxu0
    %v1500 = vmax.f32 %v1497, 0.0
    %v1501 = vld [vmem:[%s17] sm:$0x1]
    %v1502 = vld [vmem:[%s18] sm:$0x1]
    %v1503 = vsel %vm1375, %v1500, 0.0
    %v1504 = vrot.slane %v1503, 4
    %v1505 = vadd.f32 %v1503, %v1504
    %v1506 = vrot.slane %v1505, 2
    %v1507 = vadd.f32 %v1505, %v1506
    %v1508 = vrot.slane %v1507, 1
    %v1509 = vadd.f32 %v1507, %v1508
    %v1510 = vrcp.pop 2.0
    %v1511 = vmul.f32 %v1509, %v1510
    %v1512 = vmul.f32 %v1500, %v1500
    %v1513 = vsel %vm1375, %v1512, 0.0
    %v1514 = vrot.slane %v1513, 4
    %v1515 = vadd.f32 %v1513, %v1514
    %v1516 = vrot.slane %v1515, 2
    %v1517 = vadd.f32 %v1515, %v1516
    %v1518 = vrot.slane %v1517, 1
    %v1519 = vadd.f32 %v1517, %v1518
    %v1520 = vmul.f32 %v1519, %v1510
    %v1521 = vmul.f32 %v1511, %v1511
    %v1522 = vsub.f32 %v1520, %v1521
    %v1523 = vmax.f32 %v1522, 0.0
    %v1524 = vsub.f32 %v1500, %v1511
    %v1525 = vadd.f32 %v1523, 1e-05
    %v1526 = vrsqrt.pop %v1525
    %v1527 = vmul.f32 %v1524, %v1526
    %v1529 = vlaneseq
    %v1530 = vshrl.u32 %v1529, 7
    %v1531 = vsub.s32 0, %v1530
    %v1532 = vrot.slane %v1501, %v1531
    %v1534 = vmul.f32 %v1527, %v1532
    %v1536 = vlaneseq
    %v1537 = vshrl.u32 %v1536, 7
    %v1538 = vsub.s32 0, %v1537
    %v1539 = vrot.slane %v1502, %v1538
    %v1541 = vadd.f32 %v1534, %v1539
    %v1542 = vld [vmem:[#allocation11] sm:$0xff]
    %v1543 = vld [vmem:[#allocation11 + $0x8] sm:$0xff]
    %v1544 = vld [vmem:[#allocation11 + $0x10] sm:$0xff]
    %v1545 = vld [vmem:[#allocation11 + $0x18] sm:$0xff]
    %v1546 = vld [vmem:[#allocation11 + $0x20] sm:$0xff]
    %v1547 = vld [vmem:[#allocation11 + $0x28] sm:$0xff]
    %v1548 = vld [vmem:[#allocation11 + $0x30] sm:$0xff]
    %v1549 = vld [vmem:[#allocation11 + $0x38] sm:$0xff]
    %v1550 = vld [vmem:[#allocation11 + $0x40] sm:$0xff]
    %v1551 = vld [vmem:[#allocation11 + $0x48] sm:$0xff]
    %v1552 = vld [vmem:[#allocation11 + $0x50] sm:$0xff]
    %v1553 = vld [vmem:[#allocation11 + $0x58] sm:$0xff]
    %v1554 = vld [vmem:[#allocation11 + $0x60] sm:$0xff]
    %v1555 = vld [vmem:[#allocation11 + $0x68] sm:$0xff]
    %v1556 = vld [vmem:[#allocation11 + $0x70] sm:$0xff]
    %v1557 = vld [vmem:[#allocation11 + $0x78] sm:$0xff]
    %v1558 = vld [vmem:[%s20] sm:$0x1]
    %v1560 = vlaneseq
    %v1561 = vshrl.u32 %v1560, 7
    %v1562 = vsub.s32 0, %v1561
    %v1563 = vrot.slane %v1558, %v1562
    %1565 = vmatprep.subr.mxu0 0.0
    %1566 = vmatpush1.msra.mxu0 %v1542
    %1567 = vmatprep.subr.mxu0 0.0
    %1568 = vmatpush1.msra.mxu0 %v1543
    %1569 = vmatprep.subr.mxu0 0.0
    %1570 = vmatpush1.msra.mxu0 %v1544
    %1571 = vmatprep.subr.mxu0 0.0
    %1572 = vmatpush1.msra.mxu0 %v1545
    %1573 = vmatprep.subr.mxu0 0.0
    %1574 = vmatpush1.msra.mxu0 %v1546
    %1575 = vmatprep.subr.mxu0 0.0
    %1576 = vmatpush1.msra.mxu0 %v1547
    %1577 = vmatprep.subr.mxu0 0.0
    %1578 = vmatpush1.msra.mxu0 %v1548
    %1579 = vmatprep.subr.mxu0 0.0
    %1580 = vmatpush1.msra.mxu0 %v1549
    %1581 = vmatprep.subr.mxu0 0.0
    %1582 = vmatpush1.msra.mxu0 %v1550
    %1583 = vmatprep.subr.mxu0 0.0
    %1584 = vmatpush1.msra.mxu0 %v1551
    %1585 = vmatprep.subr.mxu0 0.0
    %1586 = vmatpush1.msra.mxu0 %v1552
    %1587 = vmatprep.subr.mxu0 0.0
    %1588 = vmatpush1.msra.mxu0 %v1553
    %1589 = vmatprep.subr.mxu0 0.0
    %1590 = vmatpush1.msra.mxu0 %v1554
    %1591 = vmatprep.subr.mxu0 0.0
    %1592 = vmatpush1.msra.mxu0 %v1555
    %1593 = vmatprep.subr.mxu0 0.0
    %1594 = vmatpush1.msra.mxu0 %v1556
    %1595 = vmatprep.subr.mxu0 0.0
    %1596 = vmatpush1.msra.mxu0 %v1557
    %1597 = vmatprep.subr.mxu0 0.0
    %1598 = vmatpush1.msra.mxu0 0.0
    %1599 = vmatprep.subr.mxu0 0.0
    %1600 = vmatpush1.msra.mxu0 0.0
    %1601 = vmatprep.subr.mxu0 0.0
    %1602 = vmatpush1.msra.mxu0 0.0
    %1603 = vmatprep.subr.mxu0 0.0
    %1604 = vmatpush1.msra.mxu0 0.0
    %1605 = vmatprep.subr.mxu0 0.0
    %1606 = vmatpush1.msra.mxu0 0.0
    %1607 = vmatprep.subr.mxu0 0.0
    %1608 = vmatpush1.msra.mxu0 0.0
    %1609 = vmatprep.subr.mxu0 0.0
    %1610 = vmatpush1.msra.mxu0 0.0
    %1611 = vmatprep.subr.mxu0 0.0
    %1612 = vmatpush1.msra.mxu0 0.0
    %1613 = vmatprep.subr.mxu0 0.0
    %1614 = vmatpush1.msra.mxu0 0.0
    %1615 = vmatprep.subr.mxu0 0.0
    %1616 = vmatpush1.msra.mxu0 0.0
    %1617 = vmatprep.subr.mxu0 0.0
    %1618 = vmatpush1.msra.mxu0 0.0
    %1619 = vmatprep.subr.mxu0 0.0
    %1620 = vmatpush1.msra.mxu0 0.0
    %1621 = vmatprep.subr.mxu0 0.0
    %1622 = vmatpush1.msra.mxu0 0.0
    %1623 = vmatprep.subr.mxu0 0.0
    %1624 = vmatpush1.msra.mxu0 0.0
    %1625 = vmatprep.subr.mxu0 0.0
    %1626 = vmatpush1.msra.mxu0 0.0
    %1627 = vmatprep.subr.mxu0 0.0
    %1628 = vmatpush1.msra.mxu0 0.0
    %1629 = vmatprep.mubr.f32.mxu0 0.0
    %1630 = vmatmul.mubr.f32.gmra.mrb[0].mxu0 %v1541
    %v1631 = vpop.f32.mrb[0].mxu0
    %v1632 = vadd.f32 %v1563, %v1631
    %v1633 = vpop.f32.mrb[0].mxu0
    %1634 = vdwg.mxu0
    %v1635 = vmax.f32 %v1632, 0.0
    %v1636 = vld [vmem:[%s21] sm:$0x1]
    %v1637 = vld [vmem:[%s22] sm:$0x1]
    %v1638 = vsel %vm1375, %v1635, 0.0
    %v1639 = vrot.slane %v1638, 4
    %v1640 = vadd.f32 %v1638, %v1639
    %v1641 = vrot.slane %v1640, 2
    %v1642 = vadd.f32 %v1640, %v1641
    %v1643 = vrot.slane %v1642, 1
    %v1644 = vadd.f32 %v1642, %v1643
    %v1645 = vmul.f32 %v1644, %v1510
    %v1646 = vmul.f32 %v1635, %v1635
    %v1647 = vsel %vm1375, %v1646, 0.0
    %v1648 = vrot.slane %v1647, 4
    %v1649 = vadd.f32 %v1647, %v1648
    %v1650 = vrot.slane %v1649, 2
    %v1651 = vadd.f32 %v1649, %v1650
    %v1652 = vrot.slane %v1651, 1
    %v1653 = vadd.f32 %v1651, %v1652
    %v1654 = vmul.f32 %v1653, %v1510
    %v1655 = vmul.f32 %v1645, %v1645
    %v1656 = vsub.f32 %v1654, %v1655
    %v1657 = vmax.f32 %v1656, 0.0
    %v1658 = vsub.f32 %v1635, %v1645
    %v1659 = vadd.f32 %v1657, 1e-05
    %v1660 = vrsqrt.pop %v1659
    %v1661 = vmul.f32 %v1658, %v1660
    %v1663 = vlaneseq
    %v1664 = vshrl.u32 %v1663, 7
    %v1665 = vsub.s32 0, %v1664
    %v1666 = vrot.slane %v1636, %v1665
    %v1668 = vmul.f32 %v1661, %v1666
    %v1670 = vlaneseq
    %v1671 = vshrl.u32 %v1670, 7
    %v1672 = vsub.s32 0, %v1671
    %v1673 = vrot.slane %v1637, %v1672
    %v1675 = vadd.f32 %v1668, %v1673
    %v1676 = vld [vmem:[#allocation13] sm:$0xff]
    %v1677 = vld [vmem:[#allocation13 + $0x8] sm:$0xff]
    %v1678 = vld [vmem:[#allocation13 + $0x10] sm:$0xff]
    %v1679 = vld [vmem:[#allocation13 + $0x18] sm:$0xff]
    %v1680 = vld [vmem:[#allocation13 + $0x20] sm:$0xff]
    %v1681 = vld [vmem:[#allocation13 + $0x28] sm:$0xff]
    %v1682 = vld [vmem:[#allocation13 + $0x30] sm:$0xff]
    %v1683 = vld [vmem:[#allocation13 + $0x38] sm:$0xff]
    %v1684 = vld [vmem:[#allocation13 + $0x40] sm:$0xff]
    %v1685 = vld [vmem:[#allocation13 + $0x48] sm:$0xff]
    %v1686 = vld [vmem:[#allocation13 + $0x50] sm:$0xff]
    %v1687 = vld [vmem:[#allocation13 + $0x58] sm:$0xff]
    %v1688 = vld [vmem:[#allocation13 + $0x60] sm:$0xff]
    %v1689 = vld [vmem:[#allocation13 + $0x68] sm:$0xff]
    %v1690 = vld [vmem:[#allocation13 + $0x70] sm:$0xff]
    %v1691 = vld [vmem:[#allocation13 + $0x78] sm:$0xff]
    %v1692 = vld [vmem:[%s24] sm:$0x1]
    %v1694 = vlaneseq
    %v1695 = vshrl.u32 %v1694, 7
    %v1696 = vsub.s32 0, %v1695
    %v1697 = vrot.slane %v1692, %v1696
    %1699 = vmatprep.subr.mxu0 0.0
    %1700 = vmatpush1.msra.mxu0 %v1676
    %1701 = vmatprep.subr.mxu0 0.0
    %1702 = vmatpush1.msra.mxu0 %v1677
    %1703 = vmatprep.subr.mxu0 0.0
    %1704 = vmatpush1.msra.mxu0 %v1678
    %1705 = vmatprep.subr.mxu0 0.0
    %1706 = vmatpush1.msra.mxu0 %v1679
    %1707 = vmatprep.subr.mxu0 0.0
    %1708 = vmatpush1.msra.mxu0 %v1680
    %1709 = vmatprep.subr.mxu0 0.0
    %1710 = vmatpush1.msra.mxu0 %v1681
    %1711 = vmatprep.subr.mxu0 0.0
    %1712 = vmatpush1.msra.mxu0 %v1682
    %1713 = vmatprep.subr.mxu0 0.0
    %1714 = vmatpush1.msra.mxu0 %v1683
    %1715 = vmatprep.subr.mxu0 0.0
    %1716 = vmatpush1.msra.mxu0 %v1684
    %1717 = vmatprep.subr.mxu0 0.0
    %1718 = vmatpush1.msra.mxu0 %v1685
    %1719 = vmatprep.subr.mxu0 0.0
    %1720 = vmatpush1.msra.mxu0 %v1686
    %1721 = vmatprep.subr.mxu0 0.0
    %1722 = vmatpush1.msra.mxu0 %v1687
    %1723 = vmatprep.subr.mxu0 0.0
    %1724 = vmatpush1.msra.mxu0 %v1688
    %1725 = vmatprep.subr.mxu0 0.0
    %1726 = vmatpush1.msra.mxu0 %v1689
    %1727 = vmatprep.subr.mxu0 0.0
    %1728 = vmatpush1.msra.mxu0 %v1690
    %1729 = vmatprep.subr.mxu0 0.0
    %1730 = vmatpush1.msra.mxu0 %v1691
    %1731 = vmatprep.subr.mxu0 0.0
    %1732 = vmatpush1.msra.mxu0 0.0
    %1733 = vmatprep.subr.mxu0 0.0
    %1734 = vmatpush1.msra.mxu0 0.0
    %1735 = vmatprep.subr.mxu0 0.0
    %1736 = vmatpush1.msra.mxu0 0.0
    %1737 = vmatprep.subr.mxu0 0.0
    %1738 = vmatpush1.msra.mxu0 0.0
    %1739 = vmatprep.subr.mxu0 0.0
    %1740 = vmatpush1.msra.mxu0 0.0
    %1741 = vmatprep.subr.mxu0 0.0
    %1742 = vmatpush1.msra.mxu0 0.0
    %1743 = vmatprep.subr.mxu0 0.0
    %1744 = vmatpush1.msra.mxu0 0.0
    %1745 = vmatprep.subr.mxu0 0.0
    %1746 = vmatpush1.msra.mxu0 0.0
    %1747 = vmatprep.subr.mxu0 0.0
    %1748 = vmatpush1.msra.mxu0 0.0
    %1749 = vmatprep.subr.mxu0 0.0
    %1750 = vmatpush1.msra.mxu0 0.0
    %1751 = vmatprep.subr.mxu0 0.0
    %1752 = vmatpush1.msra.mxu0 0.0
    %1753 = vmatprep.subr.mxu0 0.0
    %1754 = vmatpush1.msra.mxu0 0.0
    %1755 = vmatprep.subr.mxu0 0.0
    %1756 = vmatpush1.msra.mxu0 0.0
    %1757 = vmatprep.subr.mxu0 0.0
    %1758 = vmatpush1.msra.mxu0 0.0
    %1759 = vmatprep.subr.mxu0 0.0
    %1760 = vmatpush1.msra.mxu0 0.0
    %1761 = vmatprep.subr.mxu0 0.0
    %1762 = vmatpush1.msra.mxu0 0.0
    %1763 = vmatprep.mubr.f32.mxu0 0.0
    %1764 = vmatmul.mubr.f32.gmra.mrb[0].mxu0 %v1675
    %v1765 = vpop.f32.mrb[0].mxu0
    %v1766 = vadd.f32 %v1697, %v1765
    %v1767 = vpop.f32.mrb[0].mxu0
    %1768 = vdwg.mxu0
    %v1769 = vsub.f32 0.0, %v1766
    %v1770 = vmul.f32 %v1769, 1.442695
    %v1771 = vpow.pop %v1770
    %v1772 = vadd.f32 %v1771, 1.0
    %v1773 = vrcp.pop %v1772
    %1774 = vst [vmem:[#allocation14] sm:$0x3] %v1773
    // Predicated region
    $region130: #{tpu_custom_call.1} parent=1 // pred_check
      _
    $region131: #{tpu_custom_call.1} parent=1 // pred_check_branch
      %1776 = sbr.rel (0) target = $region133
    $region132: #{tpu_custom_call.1} parent=1 // pred_region
      %s1778 = ssub.s32 32, 32
      %1779 = vsyncadd [#allocation4], %s1778
      %s1781 = sshll.u32 [#allocation14], 4
      %s1782 = int_to_ptr.vmem [resolvable:$true] %s1781
      %1784 = dma.vmem_to_hbm [thread:$0]  %s1782, 32, %s25, [#allocation4]
    $region133: #{tpu_custom_call.1} parent=1 // pred_fallthru
      _
    // Predicated region
    $region134: #{tpu_custom_call.1} parent=1 // pred_check
      _
    $region135: #{tpu_custom_call.1} parent=1 // pred_check_branch
      %1786 = sbr.rel (0) target = $region137
    $region136: #{tpu_custom_call.1} parent=1 // pred_region
      %1787 = dma.done [#allocation4], 32
    $region137: #{tpu_custom_call.1} parent=1 // pred_fallthru
      _
    %1788 = vsyncpa [#allocation3], 1
    %1789 = vsyncpa [#allocation6], 1
    %1790 = vsyncpa [#allocation9], 1
    %1791 = vsyncpa [#allocation12], 1
    %1792 = vsyncpa [#allocation4], 1

</llo_original>
